<compile_context>
chip_gen: v7x
topology: tpu7x:2x2x1
jax: 0.10.0
libtpu: 0.0.40
codegen_flags: <defaults>
</compile_context>

<pallas_src>
import jax
import jax.numpy as jnp
from jax.experimental import pallas as pl
from jax.experimental.pallas import tpu as pltpu


# ---------------------------------------------------------------------------
# Model constants (match the PyTorch module)
# ---------------------------------------------------------------------------
HIDDEN_DIMS = (32, 32, 32, 64, 32, 32, 32)  # combine, conf, hist, passing, offense, ratings, success
TOTAL_HIDDEN = sum(HIDDEN_DIMS)             # 256
FINAL_HIDDEN = 64
OUTPUT_DIM = 3
EMBED_DIM = 8

HEAD_PAD = 128       # final-hidden padded to full 128-lane vregs (zero rows/cols)
OUT_PAD_SUB = 8      # output logits padded to 8 sublanes (zero rows)
MAX_TB = 2048        # default batch (lane-axis) tile; multiple of 128


# ---------------------------------------------------------------------------
# Kernel: fused 4-dot MLP, transposed layout (features on sublanes, batch on
# lanes).  bf16 MXU operands, f32 accumulation / bias / ReLU.
#   x_t:(Dpad,tb) -> (256,tb) -> (256,tb) -> (128,tb) -> out:(8,tb)
# ---------------------------------------------------------------------------
def _qb_kernel(x_ref, w1_ref, b1_ref, w2_ref, b2_ref,
               hw1_ref, hb1_ref, hw2_ref, hb2_ref, out_ref):
    # Block-diagonal branch layer 1 (all 7 fc1's fused) + ReLU.
    h = jnp.dot(w1_ref[...], x_ref[...], preferred_element_type=jnp.float32)
    h = jnp.maximum(h + b1_ref[...], 0.0)
    # Block-diagonal branch layer 2 (all 7 fc2's fused) + ReLU.
    # Rows are already the concatenated branch outputs -> no concat needed.
    h = jnp.dot(w2_ref[...], h.astype(jnp.bfloat16),
                preferred_element_type=jnp.float32)
    h = jnp.maximum(h + b2_ref[...], 0.0)
    # Final head fc1 (padded to 128 rows) + ReLU.
    h = jnp.dot(hw1_ref[...], h.astype(jnp.bfloat16),
                preferred_element_type=jnp.float32)
    h = jnp.maximum(h + hb1_ref[...], 0.0)
    # Final head fc2 -> narrow (8, tb) f32 output slab.
    out = jnp.dot(hw2_ref[...], h.astype(jnp.bfloat16),
                  preferred_element_type=jnp.float32)
    out_ref[...] = out + hb2_ref[...]


# ---------------------------------------------------------------------------
# Wrapper
# ---------------------------------------------------------------------------
def qb_draft_predictor(emb_table, packed, combine_data, conf_idx, conf_numeric,
                       hist_data, passing_data, offense_data, ratings_data,
                       success_data, *, output_dim=OUTPUT_DIM, max_tb=MAX_TB):
    """Same forward semantics as the PyTorch QBDraftPredictor. Returns (B, 3)."""
    d_pad = packed["d_pad"]
    w1, b1, w2, b2 = packed["w1"], packed["b1"], packed["w2"], packed["b2"]
    hw1, hb1, hw2, hb2 = packed["hw1"], packed["hb1"], packed["hw2"], packed["hb2"]

    # --- glue: embedding gather + concat + pad + transpose + bf16 cast -----
    conf_emb = emb_table[conf_idx]                                   # (B, 8)
    x = jnp.concatenate(
        [combine_data, conf_emb, conf_numeric, hist_data, passing_data,
         offense_data, ratings_data, success_data], axis=-1)         # (B, d_in)
    B, d_in = x.shape
    assert d_in == packed["d_in"], "input feature layout mismatch"
    x_t = jnp.pad(x, ((0, 0), (0, d_pad - d_in))).T.astype(jnp.bfloat16)  # (d_pad, B)

    # Batch tile on the lane axis: whole batch when small (block == full dim,
    # always legal); otherwise max_tb (a multiple of 128) lanes per grid step.
    tb = B if B <= max_tb else max_tb
    grid = (pl.cdiv(B, tb),)

    cost = pl.CostEstimate(
        flops=2 * B * (d_pad * TOTAL_HIDDEN + TOTAL_HIDDEN * TOTAL_HIDDEN
                       + TOTAL_HIDDEN * HEAD_PAD + HEAD_PAD * OUT_PAD_SUB),
        transcendentals=0,
        bytes_accessed=(2 * B * d_pad + 4 * B * OUT_PAD_SUB
                        + 2 * (w1.size + w2.size + hw1.size + hw2.size)
                        + 4 * (b1.size + b2.size + hb1.size + hb2.size)),
    )

    def resident(a):
        # Constant block index across the grid -> stays resident in VMEM.
        return pl.BlockSpec(a.shape, lambda i: (0, 0))

    out_t = pl.pallas_call(
        _qb_kernel,
        out_shape=jax.ShapeDtypeStruct((OUT_PAD_SUB, B), jnp.float32),
        grid=grid,
        in_specs=[
            pl.BlockSpec((d_pad, tb), lambda i: (0, i)),   # batched input tile
            resident(w1), resident(b1),
            resident(w2), resident(b2),
            resident(hw1), resident(hb1),
            resident(hw2), resident(hb2),
        ],
        out_specs=pl.BlockSpec((OUT_PAD_SUB, tb), lambda i: (0, i)),
        compiler_params=pltpu.CompilerParams(
            dimension_semantics=(pltpu.PARALLEL,)),
        cost_estimate=cost,
    )(x_t, w1, b1, w2, b2, hw1, hb1, hw2, hb2)

    # Tiny slice+transpose of the narrow (8, B) slab back to (B, 3).
    return out_t[:output_dim, :].T


# ---------------------------------------------------------------------------
# Parameter construction (PyTorch-like uniform(-1/sqrt(fan_in))) + packing
# ---------------------------------------------------------------------------
def _linear_params(key, in_dim, out_dim):
    k_w, k_b = jax.random.split(key)
    bound = 1.0 / jnp.sqrt(jnp.float32(in_dim))
    w = jax.random.uniform(k_w, (in_dim, out_dim), jnp.float32, -bound, bound)  # (in, out)
    b = jax.random.uniform(k_b, (1, out_dim), jnp.float32, -bound, bound)
    return w, b


def _block_diag(blocks):
    rows = sum(b.shape[0] for b in blocks)
    cols = sum(b.shape[1] for b in blocks)
    out = jnp.zeros((rows, cols), jnp.float32)
    r = c = 0
    for blk in blocks:
        out = out.at[r:r + blk.shape[0], c:c + blk.shape[1]].set(blk)
        r += blk.shape[0]
        c += blk.shape[1]
    return out


def make_params(key, dims):
    (combine_dim, conf_num, conf_other_dim, hist_dim, passing_dim,
     offense_dim, ratings_dim, success_dim) = dims

    keys = jax.random.split(key, 20)
    ki = iter(keys)

    emb_table = jax.random.normal(next(ki), (conf_num, EMBED_DIM), jnp.float32)

    branch_in_dims = [
        combine_dim,
        EMBED_DIM + conf_other_dim,
        hist_dim,
        passing_dim,
        offense_dim,
        ratings_dim,
        success_dim,
    ]

    branch_params = []  # flat per-branch (w1, b1, w2, b2) for the f32 reference
    w1_blocks, b1_rows, w2_blocks, b2_rows = [], [], [], []
    for in_d, hid in zip(branch_in_dims, HIDDEN_DIMS):
        w1, b1 = _linear_params(next(ki), in_d, hid)
        w2, b2 = _linear_params(next(ki), hid, hid)
        branch_params += [w1, b1, w2, b2]
        w1_blocks.append(w1)
        b1_rows.append(b1)
        w2_blocks.append(w2)
        b2_rows.append(b2)

    hw1, hb1 = _linear_params(next(ki), TOTAL_HIDDEN, FINAL_HIDDEN)
    hw2, hb2 = _linear_params(next(ki), FINAL_HIDDEN, OUTPUT_DIM)
    branch_params += [hw1, hb1, hw2, hb2]

    d_in = sum(branch_in_dims)
    d_pad = ((d_in + 63) // 64) * 64   # pad input features to a multiple of 64

    # --- pack into transposed, padded, bf16 slabs for the kernel (exact) ---
    w1_bd_t = _block_diag(w1_blocks).T                               # (256, d_in)
    w1_t = jnp.zeros((TOTAL_HIDDEN, d_pad), jnp.float32).at[:, :d_in].set(w1_bd_t)
    b1_t = jnp.concatenate(b1_rows, axis=-1).T                       # (256, 1)
    w2_t = _block_diag(w2_blocks).T                                  # (256, 256)
    b2_t = jnp.concatenate(b2_rows, axis=-1).T                       # (256, 1)
    hw1_t = jnp.zeros((HEAD_PAD, TOTAL_HIDDEN), jnp.float32
                      ).at[:FINAL_HIDDEN, :].set(hw1.T)              # (128, 256)
    hb1_t = jnp.zeros((HEAD_PAD, 1), jnp.float32
                      ).at[:FINAL_HIDDEN, :].set(hb1.T)              # (128, 1)
    hw2_t = jnp.zeros((OUT_PAD_SUB, HEAD_PAD), jnp.float32
                      ).at[:OUTPUT_DIM, :FINAL_HIDDEN].set(hw2.T)    # (8, 128)
    hb2_t = jnp.zeros((OUT_PAD_SUB, 1), jnp.float32
                      ).at[:OUTPUT_DIM, :].set(hb2.T)                # (8, 1)

    packed = dict(
        w1=w1_t.astype(jnp.bfloat16), b1=b1_t,
        w2=w2_t.astype(jnp.bfloat16), b2=b2_t,
        hw1=hw1_t.astype(jnp.bfloat16), hb1=hb1_t,
        hw2=hw2_t.astype(jnp.bfloat16), hb2=hb2_t,
        d_in=d_in, d_pad=d_pad,
    )
    return emb_table, branch_params, packed


# ---------------------------------------------------------------------------
# Pure-JAX f32 reference (per-branch formulation) for sanity checking
# ---------------------------------------------------------------------------
def reference(inputs, params):
    def branch(x, w1, b1, w2, b2):
        h = jnp.maximum(x @ w1 + b1, 0.0)
        return jnp.maximum(h @ w2 + b2, 0.0)

    outs = []
    for i in range(7):
        w1, b1, w2, b2 = params[4 * i: 4 * i + 4]
        outs.append(branch(inputs[i], w1, b1, w2, b2))
    x = jnp.concatenate(outs, axis=-1)
    hw1, hb1, hw2, hb2 = params[28:32]
    h = jnp.maximum(x @ hw1 + hb1, 0.0)
    return h @ hw2 + hb2


# ---------------------------------------------------------------------------
if __name__ == "__main__":
    batch = 8
    combine_dim, conf_num, conf_other_dim = 6, 10, 5
    hist_dim, passing_dim = 4, 7
    offense_dim, ratings_dim, success_dim = 5, 4, 6

    key = jax.random.PRNGKey(0)
    k_param, k_in, k_in2 = jax.random.split(key, 3)
    emb_table, branch_params, packed = make_params(
        k_param,
        (combine_dim, conf_num, conf_other_dim, hist_dim, passing_dim,
         offense_dim, ratings_dim, success_dim),
    )

    def make_inputs(k, B):
        ks = jax.random.split(k, 8)
        return dict(
            combine_data=jax.random.normal(ks[0], (B, combine_dim), jnp.float32),
            conf_idx=jax.random.randint(ks[1], (B,), 0, conf_num, jnp.int32),
            conf_numeric=jax.random.normal(ks[2], (B, conf_other_dim), jnp.float32),
            hist_data=jax.random.normal(ks[3], (B, hist_dim), jnp.float32),
            passing_data=jax.random.normal(ks[4], (B, passing_dim), jnp.float32),
            offense_data=jax.random.normal(ks[5], (B, offense_dim), jnp.float32),
            ratings_data=jax.random.normal(ks[6], (B, ratings_dim), jnp.float32),
            success_data=jax.random.normal(ks[7], (B, success_dim), jnp.float32),
        )

    def ref_from_inputs(inp):
        conf_x = jnp.concatenate([emb_table[inp["conf_idx"]], inp["conf_numeric"]], axis=-1)
        return reference(
            [inp["combine_data"], conf_x, inp["hist_data"], inp["passing_data"],
             inp["offense_data"], inp["ratings_data"], inp["success_data"]],
            branch_params)

    # --- primary check: small batch, single-step grid ----------------------
    inputs = make_inputs(k_in, batch)
    logits = jax.block_until_ready(qb_draft_predictor(emb_table, packed, **inputs))
    ref = ref_from_inputs(inputs)
    assert logits.shape == (batch, OUTPUT_DIM)
    # bf16 MXU operands -> relaxed tolerance vs the f32 reference.
    assert jnp.allclose(logits, ref, atol=5e-2, rtol=5e-2), "mismatch vs reference"

    # --- secondary check: multi-step grid path (B=256, tb=128, grid=(2,)) --
    inputs2 = make_inputs(k_in2, 256)
    logits2 = jax.block_until_ready(
        qb_draft_predictor(emb_table, packed, **inputs2, max_tb=128))
    ref2 = ref_from_inputs(inputs2)
    assert logits2.shape == (256, OUTPUT_DIM)
    assert jnp.allclose(logits2, ref2, atol=5e-2, rtol=5e-2), "mismatch vs reference (tiled)"

    print("KERNEL_OK")
</pallas_src>

<mosaic_0001>
module attributes {stable_mosaic.version = 11 : i64} {
  func.func @_qb_kernel(%arg0: i32, %arg1: memref<64x8xbf16, #tpu.memory_space<vmem>>, %arg2: memref<256x64xbf16, #tpu.memory_space<vmem>>, %arg3: memref<256x1xf32, #tpu.memory_space<vmem>>, %arg4: memref<256x256xbf16, #tpu.memory_space<vmem>>, %arg5: memref<256x1xf32, #tpu.memory_space<vmem>>, %arg6: memref<128x256xbf16, #tpu.memory_space<vmem>>, %arg7: memref<128x1xf32, #tpu.memory_space<vmem>>, %arg8: memref<8x128xbf16, #tpu.memory_space<vmem>>, %arg9: memref<8x1xf32, #tpu.memory_space<vmem>>, %arg10: memref<8x8xf32, #tpu.memory_space<vmem>>) attributes {dimension_semantics = [#tpu.dimension_semantics<parallel>], iteration_bounds = array<i64: 1>, scalar_prefetch = 0 : i64, scratch_operands = 0 : i64, tpu.core_type = #tpu.core_type<tc>, window_params = [{transform_indices = @transform_0, window_bounds = array<i64: 64, 8>}, {pipeline_mode = #tpu.pipeline_mode<synchronous>, transform_indices = @transform_1, window_bounds = array<i64: 256, 64>}, {pipeline_mode = #tpu.pipeline_mode<synchronous>, transform_indices = @transform_2, window_bounds = array<i64: 256, 1>}, {pipeline_mode = #tpu.pipeline_mode<synchronous>, transform_indices = @transform_3, window_bounds = array<i64: 256, 256>}, {pipeline_mode = #tpu.pipeline_mode<synchronous>, transform_indices = @transform_4, window_bounds = array<i64: 256, 1>}, {pipeline_mode = #tpu.pipeline_mode<synchronous>, transform_indices = @transform_5, window_bounds = array<i64: 128, 256>}, {pipeline_mode = #tpu.pipeline_mode<synchronous>, transform_indices = @transform_6, window_bounds = array<i64: 128, 1>}, {pipeline_mode = #tpu.pipeline_mode<synchronous>, transform_indices = @transform_7, window_bounds = array<i64: 8, 128>}, {pipeline_mode = #tpu.pipeline_mode<synchronous>, transform_indices = @transform_8, window_bounds = array<i64: 8, 1>}, {transform_indices = @transform_9, window_bounds = array<i64: 8, 8>}]} {
    %c0 = arith.constant 0 : index
    %c0_0 = arith.constant 0 : index
    %0 = vector.load %arg2[%c0, %c0_0] : memref<256x64xbf16, #tpu.memory_space<vmem>>, vector<256x64xbf16>
    %c0_1 = arith.constant 0 : index
    %c0_2 = arith.constant 0 : index
    %1 = vector.load %arg1[%c0_1, %c0_2] : memref<64x8xbf16, #tpu.memory_space<vmem>>, vector<64x8xbf16>
    %cst = arith.constant dense<0.000000e+00> : vector<256x8xf32>
    %2 = tpu.matmul %0, %1, %cst {dimension_numbers = #tpu.dot_dimension_numbers<[1], [0], [0], [1], [0, 0, 1, 1], [], []>} : vector<256x64xbf16>, vector<64x8xbf16>, vector<256x8xf32> -> vector<256x8xf32>
    %c0_3 = arith.constant 0 : index
    %c0_4 = arith.constant 0 : index
    %3 = vector.load %arg3[%c0_3, %c0_4] : memref<256x1xf32, #tpu.memory_space<vmem>>, vector<256x1xf32>
    %4 = vector.broadcast %3 : vector<256x1xf32> to vector<256x8xf32>
    %5 = arith.addf %2, %4 : vector<256x8xf32>
    %cst_5 = arith.constant 0.000000e+00 : f32
    %6 = vector.broadcast %cst_5 : f32 to vector<256x8xf32>
    %7 = arith.maximumf %5, %6 : vector<256x8xf32>
    %c0_6 = arith.constant 0 : index
    %c0_7 = arith.constant 0 : index
    %8 = vector.load %arg4[%c0_6, %c0_7] : memref<256x256xbf16, #tpu.memory_space<vmem>>, vector<256x256xbf16>
    %9 = arith.truncf %7 : vector<256x8xf32> to vector<256x8xbf16>
    %cst_8 = arith.constant dense<0.000000e+00> : vector<256x8xf32>
    %10 = tpu.matmul %8, %9, %cst_8 {dimension_numbers = #tpu.dot_dimension_numbers<[1], [0], [0], [1], [0, 0, 1, 1], [], []>} : vector<256x256xbf16>, vector<256x8xbf16>, vector<256x8xf32> -> vector<256x8xf32>
    %c0_9 = arith.constant 0 : index
    %c0_10 = arith.constant 0 : index
    %11 = vector.load %arg5[%c0_9, %c0_10] : memref<256x1xf32, #tpu.memory_space<vmem>>, vector<256x1xf32>
    %12 = vector.broadcast %11 : vector<256x1xf32> to vector<256x8xf32>
    %13 = arith.addf %10, %12 : vector<256x8xf32>
    %cst_11 = arith.constant 0.000000e+00 : f32
    %14 = vector.broadcast %cst_11 : f32 to vector<256x8xf32>
    %15 = arith.maximumf %13, %14 : vector<256x8xf32>
    %c0_12 = arith.constant 0 : index
    %c0_13 = arith.constant 0 : index
    %16 = vector.load %arg6[%c0_12, %c0_13] : memref<128x256xbf16, #tpu.memory_space<vmem>>, vector<128x256xbf16>
    %17 = arith.truncf %15 : vector<256x8xf32> to vector<256x8xbf16>
    %cst_14 = arith.constant dense<0.000000e+00> : vector<128x8xf32>
    %18 = tpu.matmul %16, %17, %cst_14 {dimension_numbers = #tpu.dot_dimension_numbers<[1], [0], [0], [1], [0, 0, 1, 1], [], []>} : vector<128x256xbf16>, vector<256x8xbf16>, vector<128x8xf32> -> vector<128x8xf32>
    %c0_15 = arith.constant 0 : index
    %c0_16 = arith.constant 0 : index
    %19 = vector.load %arg7[%c0_15, %c0_16] : memref<128x1xf32, #tpu.memory_space<vmem>>, vector<128x1xf32>
    %20 = vector.broadcast %19 : vector<128x1xf32> to vector<128x8xf32>
    %21 = arith.addf %18, %20 : vector<128x8xf32>
    %cst_17 = arith.constant 0.000000e+00 : f32
    %22 = vector.broadcast %cst_17 : f32 to vector<128x8xf32>
    %23 = arith.maximumf %21, %22 : vector<128x8xf32>
    %c0_18 = arith.constant 0 : index
    %c0_19 = arith.constant 0 : index
    %24 = vector.load %arg8[%c0_18, %c0_19] : memref<8x128xbf16, #tpu.memory_space<vmem>>, vector<8x128xbf16>
    %25 = arith.truncf %23 : vector<128x8xf32> to vector<128x8xbf16>
    %cst_20 = arith.constant dense<0.000000e+00> : vector<8x8xf32>
    %26 = tpu.matmul %24, %25, %cst_20 {dimension_numbers = #tpu.dot_dimension_numbers<[1], [0], [0], [1], [0, 0, 1, 1], [], []>} : vector<8x128xbf16>, vector<128x8xbf16>, vector<8x8xf32> -> vector<8x8xf32>
    %c0_21 = arith.constant 0 : index
    %c0_22 = arith.constant 0 : index
    %27 = vector.load %arg9[%c0_21, %c0_22] : memref<8x1xf32, #tpu.memory_space<vmem>>, vector<8x1xf32>
    %28 = vector.broadcast %27 : vector<8x1xf32> to vector<8x8xf32>
    %29 = arith.addf %26, %28 : vector<8x8xf32>
    %c0_23 = arith.constant 0 : index
    %c0_24 = arith.constant 0 : index
    %30 = vector.load %arg10[%c0_23, %c0_24] : memref<8x8xf32, #tpu.memory_space<vmem>>, vector<8x8xf32>
    tpu.vector_store %arg10[%c0_23, %c0_24], %29 {strides = array<i32>} : memref<8x8xf32, #tpu.memory_space<vmem>>, vector<8x8xf32>,
    return
  }
  func.func @transform_0(%arg0: i32) -> (i32, i32) {
    %c0_i32 = arith.constant 0 : i32
    %c0_i32_0 = arith.constant 0 : i32
    return %c0_i32, %arg0 : i32, i32
  }
  func.func @transform_1(%arg0: i32) -> (i32, i32) {
    %c0_i32 = arith.constant 0 : i32
    %c0_i32_0 = arith.constant 0 : i32
    %c0_i32_1 = arith.constant 0 : i32
    return %c0_i32, %c0_i32_0 : i32, i32
  }
  func.func @transform_2(%arg0: i32) -> (i32, i32) {
    %c0_i32 = arith.constant 0 : i32
    %c0_i32_0 = arith.constant 0 : i32
    %c0_i32_1 = arith.constant 0 : i32
    return %c0_i32, %c0_i32_0 : i32, i32
  }
  func.func @transform_3(%arg0: i32) -> (i32, i32) {
    %c0_i32 = arith.constant 0 : i32
    %c0_i32_0 = arith.constant 0 : i32
    %c0_i32_1 = arith.constant 0 : i32
    return %c0_i32, %c0_i32_0 : i32, i32
  }
  func.func @transform_4(%arg0: i32) -> (i32, i32) {
    %c0_i32 = arith.constant 0 : i32
    %c0_i32_0 = arith.constant 0 : i32
    %c0_i32_1 = arith.constant 0 : i32
    return %c0_i32, %c0_i32_0 : i32, i32
  }
  func.func @transform_5(%arg0: i32) -> (i32, i32) {
    %c0_i32 = arith.constant 0 : i32
    %c0_i32_0 = arith.constant 0 : i32
    %c0_i32_1 = arith.constant 0 : i32
    return %c0_i32, %c0_i32_0 : i32, i32
  }
  func.func @transform_6(%arg0: i32) -> (i32, i32) {
    %c0_i32 = arith.constant 0 : i32
    %c0_i32_0 = arith.constant 0 : i32
    %c0_i32_1 = arith.constant 0 : i32
    return %c0_i32, %c0_i32_0 : i32, i32
  }
  func.func @transform_7(%arg0: i32) -> (i32, i32) {
    %c0_i32 = arith.constant 0 : i32
    %c0_i32_0 = arith.constant 0 : i32
    %c0_i32_1 = arith.constant 0 : i32
    return %c0_i32, %c0_i32_0 : i32, i32
  }
  func.func @transform_8(%arg0: i32) -> (i32, i32) {
    %c0_i32 = arith.constant 0 : i32
    %c0_i32_0 = arith.constant 0 : i32
    %c0_i32_1 = arith.constant 0 : i32
    return %c0_i32, %c0_i32_0 : i32, i32
  }
  func.func @transform_9(%arg0: i32) -> (i32, i32) {
    %c0_i32 = arith.constant 0 : i32
    %c0_i32_0 = arith.constant 0 : i32
    return %c0_i32, %arg0 : i32, i32
  }
}

</mosaic_0001>

<llo_original>
// kernel: tpu_custom_call.1
$region0: #{tpu_custom_call.1}
  #allocation0 [shape = 'u32[]', space=smem, size = 0x4, offset = 0x4, fixed_abs, tag = 'smem constant byte address 0x4 - core index']
  #allocation1 [shape = 'u32[144,128]{1,0:T(1,128)}', space=vmem, size = 0x12000, scoped, tag = 'internal scratch']
  %s0 = inlined_call_operand.vmem [shape: bf16[64,8], index: 0, kind: input, shape index: {}]
  %s1 = inlined_call_operand.vmem [shape: bf16[256,64], index: 1, kind: input, shape index: {}]
  %s2 = inlined_call_operand.vmem [shape: f32[256,1], index: 2, kind: input, shape index: {}]
  %s3 = inlined_call_operand.vmem [shape: bf16[256,256], index: 3, kind: input, shape index: {}]
  %s4 = inlined_call_operand.vmem [shape: f32[256,1], index: 4, kind: input, shape index: {}]
  %s5 = inlined_call_operand.vmem [shape: bf16[128,256], index: 5, kind: input, shape index: {}]
  %s6 = inlined_call_operand.vmem [shape: f32[128,1], index: 6, kind: input, shape index: {}]
  %s7 = inlined_call_operand.vmem [shape: bf16[8,128], index: 7, kind: input, shape index: {}]
  %s8 = inlined_call_operand.vmem [shape: f32[8,1], index: 8, kind: input, shape index: {}]
  %s9 = inlined_call_operand.hbm [shape: f32[8,8], index: 9, kind: output, shape index: {}]
  %s10 = sld [smem:[#allocation0]]
  $region46: #{tpu_custom_call.1} parent=0
    _
  %s12 = ssub.s32 1, %s10
  %s13 = scalar_select 0, %s12, %s10
  $region1: #{tpu_custom_call.1} parent=0
    #allocation2 [shape = 'u8[4096]{0}', space=vmem, size = 0x1000, scoped, tag = 'output window, operand 0, single buffered']
    #allocation3 [shape = 's32[1]{0}', space=sflag, size = 0x4, scoped, tag = 'scoped memory for tpu_custom_call.1']
    %14 = vsyncpa [#allocation3], 0
    // Predicated region
    $region2: #{tpu_custom_call.1} parent=1 // pred_check
      _
    $region3: #{tpu_custom_call.1} parent=1 // pred_check_branch
      %16 = sbr.rel (0) target = $region5
    $region4: #{tpu_custom_call.1} parent=1 // pred_region
      _
    $region5: #{tpu_custom_call.1} parent=1 // pred_fallthru
      _
    // Predicated region
    $region6: #{tpu_custom_call.1} parent=1 // pred_check
      _
    $region7: #{tpu_custom_call.1} parent=1 // pred_check_branch
      %18 = sbr.rel (0) target = $region9
    $region8: #{tpu_custom_call.1} parent=1 // pred_region
      _
    $region9: #{tpu_custom_call.1} parent=1 // pred_fallthru
      _
    // Predicated region
    $region10: #{tpu_custom_call.1} parent=1 // pred_check
      _
    $region11: #{tpu_custom_call.1} parent=1 // pred_check_branch
      %20 = sbr.rel (0) target = $region13
    $region12: #{tpu_custom_call.1} parent=1 // pred_region
      _
    $region13: #{tpu_custom_call.1} parent=1 // pred_fallthru
      _
    // Predicated region
    $region14: #{tpu_custom_call.1} parent=1 // pred_check
      _
    $region15: #{tpu_custom_call.1} parent=1 // pred_check_branch
      %22 = sbr.rel (0) target = $region17
    $region16: #{tpu_custom_call.1} parent=1 // pred_region
      _
    $region17: #{tpu_custom_call.1} parent=1 // pred_fallthru
      _
    // Predicated region
    $region18: #{tpu_custom_call.1} parent=1 // pred_check
      _
    $region19: #{tpu_custom_call.1} parent=1 // pred_check_branch
      %24 = sbr.rel (0) target = $region21
    $region20: #{tpu_custom_call.1} parent=1 // pred_region
      _
    $region21: #{tpu_custom_call.1} parent=1 // pred_fallthru
      _
    // Predicated region
    $region22: #{tpu_custom_call.1} parent=1 // pred_check
      _
    $region23: #{tpu_custom_call.1} parent=1 // pred_check_branch
      %26 = sbr.rel (0) target = $region25
    $region24: #{tpu_custom_call.1} parent=1 // pred_region
      _
    $region25: #{tpu_custom_call.1} parent=1 // pred_fallthru
      _
    // Predicated region
    $region26: #{tpu_custom_call.1} parent=1 // pred_check
      _
    $region27: #{tpu_custom_call.1} parent=1 // pred_check_branch
      %28 = sbr.rel (0) target = $region29
    $region28: #{tpu_custom_call.1} parent=1 // pred_region
      _
    $region29: #{tpu_custom_call.1} parent=1 // pred_fallthru
      _
    // Predicated region
    $region30: #{tpu_custom_call.1} parent=1 // pred_check
      _
    $region31: #{tpu_custom_call.1} parent=1 // pred_check_branch
      %30 = sbr.rel (0) target = $region33
    $region32: #{tpu_custom_call.1} parent=1 // pred_region
      _
    $region33: #{tpu_custom_call.1} parent=1 // pred_fallthru
      _
    // Predicated region
    $region34: #{tpu_custom_call.1} parent=1 // pred_check
      _
    $region35: #{tpu_custom_call.1} parent=1 // pred_check_branch
      %32 = sbr.rel (0) target = $region37
    $region36: #{tpu_custom_call.1} parent=1 // pred_region
      _
    $region37: #{tpu_custom_call.1} parent=1 // pred_fallthru
      _
    %v34 = vld [vmem:[%s1] sm:$0xf]
    %v35 = vld [vmem:[%s1 + $0x4] sm:$0xf]
    %v36 = vld [vmem:[%s1 + $0x8] sm:$0xf]
    %v37 = vld [vmem:[%s1 + $0xc] sm:$0xf]
    %v38 = vld [vmem:[%s1 + $0x10] sm:$0xf]
    %v39 = vld [vmem:[%s1 + $0x14] sm:$0xf]
    %v40 = vld [vmem:[%s1 + $0x18] sm:$0xf]
    %v41 = vld [vmem:[%s1 + $0x1c] sm:$0xf]
    %v42 = vld [vmem:[%s1 + $0x20] sm:$0xf]
    %v43 = vld [vmem:[%s1 + $0x24] sm:$0xf]
    %v44 = vld [vmem:[%s1 + $0x28] sm:$0xf]
    %v45 = vld [vmem:[%s1 + $0x2c] sm:$0xf]
    %v46 = vld [vmem:[%s1 + $0x30] sm:$0xf]
    %v47 = vld [vmem:[%s1 + $0x34] sm:$0xf]
    %v48 = vld [vmem:[%s1 + $0x38] sm:$0xf]
    %v49 = vld [vmem:[%s1 + $0x3c] sm:$0xf]
    %v50 = vld [vmem:[%s1 + $0x40] sm:$0xf]
    %v51 = vld [vmem:[%s1 + $0x44] sm:$0xf]
    %v52 = vld [vmem:[%s1 + $0x48] sm:$0xf]
    %v53 = vld [vmem:[%s1 + $0x4c] sm:$0xf]
    %v54 = vld [vmem:[%s1 + $0x50] sm:$0xf]
    %v55 = vld [vmem:[%s1 + $0x54] sm:$0xf]
    %v56 = vld [vmem:[%s1 + $0x58] sm:$0xf]
    %v57 = vld [vmem:[%s1 + $0x5c] sm:$0xf]
    %v58 = vld [vmem:[%s1 + $0x60] sm:$0xf]
    %v59 = vld [vmem:[%s1 + $0x64] sm:$0xf]
    %v60 = vld [vmem:[%s1 + $0x68] sm:$0xf]
    %v61 = vld [vmem:[%s1 + $0x6c] sm:$0xf]
    %v62 = vld [vmem:[%s1 + $0x70] sm:$0xf]
    %v63 = vld [vmem:[%s1 + $0x74] sm:$0xf]
    %v64 = vld [vmem:[%s1 + $0x78] sm:$0xf]
    %v65 = vld [vmem:[%s1 + $0x7c] sm:$0xf]
    %v66 = vld [vmem:[%s0] sm:$0xf]
    %v67 = vld [vmem:[%s0 + $0x4] sm:$0xf]
    %v68 = vld [vmem:[%s0 + $0x8] sm:$0xf]
    %v69 = vld [vmem:[%s0 + $0xc] sm:$0xf]
    %v70 = vld [vmem:[%s0 + $0x10] sm:$0xf]
    %v71 = vld [vmem:[%s0 + $0x14] sm:$0xf]
    %v72 = vld [vmem:[%s0 + $0x18] sm:$0xf]
    %v73 = vld [vmem:[%s0 + $0x1c] sm:$0xf]
    %v74 = vld [vmem:[%s2] sm:$0xff]
    %v75 = vld [vmem:[%s2 + $0x8] sm:$0xff]
    %v76 = vld [vmem:[%s2 + $0x10] sm:$0xff]
    %v77 = vld [vmem:[%s2 + $0x18] sm:$0xff]
    %v78 = vld [vmem:[%s2 + $0x20] sm:$0xff]
    %v79 = vld [vmem:[%s2 + $0x28] sm:$0xff]
    %v80 = vld [vmem:[%s2 + $0x30] sm:$0xff]
    %v81 = vld [vmem:[%s2 + $0x38] sm:$0xff]
    %v82 = vld [vmem:[%s2 + $0x40] sm:$0xff]
    %v83 = vld [vmem:[%s2 + $0x48] sm:$0xff]
    %v84 = vld [vmem:[%s2 + $0x50] sm:$0xff]
    %v85 = vld [vmem:[%s2 + $0x58] sm:$0xff]
    %v86 = vld [vmem:[%s2 + $0x60] sm:$0xff]
    %v87 = vld [vmem:[%s2 + $0x68] sm:$0xff]
    %v88 = vld [vmem:[%s2 + $0x70] sm:$0xff]
    %v89 = vld [vmem:[%s2 + $0x78] sm:$0xff]
    %v90 = vld [vmem:[%s2 + $0x80] sm:$0xff]
    %v91 = vld [vmem:[%s2 + $0x88] sm:$0xff]
    %v92 = vld [vmem:[%s2 + $0x90] sm:$0xff]
    %v93 = vld [vmem:[%s2 + $0x98] sm:$0xff]
    %v94 = vld [vmem:[%s2 + $0xa0] sm:$0xff]
    %v95 = vld [vmem:[%s2 + $0xa8] sm:$0xff]
    %v96 = vld [vmem:[%s2 + $0xb0] sm:$0xff]
    %v97 = vld [vmem:[%s2 + $0xb8] sm:$0xff]
    %v98 = vld [vmem:[%s2 + $0xc0] sm:$0xff]
    %v99 = vld [vmem:[%s2 + $0xc8] sm:$0xff]
    %v100 = vld [vmem:[%s2 + $0xd0] sm:$0xff]
    %v101 = vld [vmem:[%s2 + $0xd8] sm:$0xff]
    %v102 = vld [vmem:[%s2 + $0xe0] sm:$0xff]
    %v103 = vld [vmem:[%s2 + $0xe8] sm:$0xff]
    %v104 = vld [vmem:[%s2 + $0xf0] sm:$0xff]
    %v105 = vld [vmem:[%s2 + $0xf8] sm:$0xff]
    %107 = vset.pattern.permute.xlu0 0
    %108 = vperm.xlu0 %107, %v74
    %v109 = vpop.permute.xlu0 %108
    %112 = vset.pattern.permute.xlu0 0
    %113 = vperm.xlu0 %112, %v75
    %v114 = vpop.permute.xlu0 %113
    %117 = vset.pattern.permute.xlu0 0
    %118 = vperm.xlu0 %117, %v76
    %v119 = vpop.permute.xlu0 %118
    %122 = vset.pattern.permute.xlu0 0
    %123 = vperm.xlu0 %122, %v77
    %v124 = vpop.permute.xlu0 %123
    %127 = vset.pattern.permute.xlu0 0
    %128 = vperm.xlu0 %127, %v78
    %v129 = vpop.permute.xlu0 %128
    %132 = vset.pattern.permute.xlu0 0
    %133 = vperm.xlu0 %132, %v79
    %v134 = vpop.permute.xlu0 %133
    %137 = vset.pattern.permute.xlu0 0
    %138 = vperm.xlu0 %137, %v80
    %v139 = vpop.permute.xlu0 %138
    %142 = vset.pattern.permute.xlu0 0
    %143 = vperm.xlu0 %142, %v81
    %v144 = vpop.permute.xlu0 %143
    %147 = vset.pattern.permute.xlu0 0
    %148 = vperm.xlu0 %147, %v82
    %v149 = vpop.permute.xlu0 %148
    %152 = vset.pattern.permute.xlu0 0
    %153 = vperm.xlu0 %152, %v83
    %v154 = vpop.permute.xlu0 %153
    %157 = vset.pattern.permute.xlu0 0
    %158 = vperm.xlu0 %157, %v84
    %v159 = vpop.permute.xlu0 %158
    %162 = vset.pattern.permute.xlu0 0
    %163 = vperm.xlu0 %162, %v85
    %v164 = vpop.permute.xlu0 %163
    %167 = vset.pattern.permute.xlu0 0
    %168 = vperm.xlu0 %167, %v86
    %v169 = vpop.permute.xlu0 %168
    %172 = vset.pattern.permute.xlu0 0
    %173 = vperm.xlu0 %172, %v87
    %v174 = vpop.permute.xlu0 %173
    %177 = vset.pattern.permute.xlu0 0
    %178 = vperm.xlu0 %177, %v88
    %v179 = vpop.permute.xlu0 %178
    %182 = vset.pattern.permute.xlu0 0
    %183 = vperm.xlu0 %182, %v89
    %v184 = vpop.permute.xlu0 %183
    %187 = vset.pattern.permute.xlu0 0
    %188 = vperm.xlu0 %187, %v90
    %v189 = vpop.permute.xlu0 %188
    %192 = vset.pattern.permute.xlu0 0
    %193 = vperm.xlu0 %192, %v91
    %v194 = vpop.permute.xlu0 %193
    %197 = vset.pattern.permute.xlu0 0
    %198 = vperm.xlu0 %197, %v92
    %v199 = vpop.permute.xlu0 %198
    %202 = vset.pattern.permute.xlu0 0
    %203 = vperm.xlu0 %202, %v93
    %v204 = vpop.permute.xlu0 %203
    %207 = vset.pattern.permute.xlu0 0
    %208 = vperm.xlu0 %207, %v94
    %v209 = vpop.permute.xlu0 %208
    %212 = vset.pattern.permute.xlu0 0
    %213 = vperm.xlu0 %212, %v95
    %v214 = vpop.permute.xlu0 %213
    %217 = vset.pattern.permute.xlu0 0
    %218 = vperm.xlu0 %217, %v96
    %v219 = vpop.permute.xlu0 %218
    %222 = vset.pattern.permute.xlu0 0
    %223 = vperm.xlu0 %222, %v97
    %v224 = vpop.permute.xlu0 %223
    %227 = vset.pattern.permute.xlu0 0
    %228 = vperm.xlu0 %227, %v98
    %v229 = vpop.permute.xlu0 %228
    %232 = vset.pattern.permute.xlu0 0
    %233 = vperm.xlu0 %232, %v99
    %v234 = vpop.permute.xlu0 %233
    %237 = vset.pattern.permute.xlu0 0
    %238 = vperm.xlu0 %237, %v100
    %v239 = vpop.permute.xlu0 %238
    %242 = vset.pattern.permute.xlu0 0
    %243 = vperm.xlu0 %242, %v101
    %v244 = vpop.permute.xlu0 %243
    %247 = vset.pattern.permute.xlu0 0
    %248 = vperm.xlu0 %247, %v102
    %v249 = vpop.permute.xlu0 %248
    %252 = vset.pattern.permute.xlu0 0
    %253 = vperm.xlu0 %252, %v103
    %v254 = vpop.permute.xlu0 %253
    %257 = vset.pattern.permute.xlu0 0
    %258 = vperm.xlu0 %257, %v104
    %v259 = vpop.permute.xlu0 %258
    %262 = vset.pattern.permute.xlu0 0
    %263 = vperm.xlu0 %262, %v105
    %v264 = vpop.permute.xlu0 %263
    %v298 = vunpack.c.l.b16 %v34
    %v299 = vunpack.c.l.b16 %v35
    %v300 = vunpack.c.l.b16 %v36
    %v301 = vunpack.c.l.b16 %v37
    %v302 = vunpack.c.l.b16 %v38
    %v303 = vunpack.c.l.b16 %v39
    %v304 = vunpack.c.l.b16 %v40
    %v305 = vunpack.c.l.b16 %v41
    %v306 = vunpack.c.l.b16 %v42
    %v307 = vunpack.c.l.b16 %v43
    %v308 = vunpack.c.l.b16 %v44
    %v309 = vunpack.c.l.b16 %v45
    %v310 = vunpack.c.l.b16 %v46
    %v311 = vunpack.c.l.b16 %v47
    %v312 = vunpack.c.l.b16 %v48
    %v313 = vunpack.c.l.b16 %v49
    %v314 = vunpack.c.l.b16 %v50
    %v315 = vunpack.c.l.b16 %v51
    %v316 = vunpack.c.l.b16 %v52
    %v317 = vunpack.c.l.b16 %v53
    %v318 = vunpack.c.l.b16 %v54
    %v319 = vunpack.c.l.b16 %v55
    %v320 = vunpack.c.l.b16 %v56
    %v321 = vunpack.c.l.b16 %v57
    %v322 = vunpack.c.l.b16 %v58
    %v323 = vunpack.c.l.b16 %v59
    %v324 = vunpack.c.l.b16 %v60
    %v325 = vunpack.c.l.b16 %v61
    %v326 = vunpack.c.l.b16 %v62
    %v327 = vunpack.c.l.b16 %v63
    %v328 = vunpack.c.l.b16 %v64
    %v329 = vunpack.c.l.b16 %v65
    %v330 = vpack.c.b16 %v299, %v298
    %v331 = vpack.c.b16 %v301, %v300
    %v332 = vpack.c.b16 %v303, %v302
    %v333 = vpack.c.b16 %v305, %v304
    %v334 = vpack.c.b16 %v307, %v306
    %v335 = vpack.c.b16 %v309, %v308
    %v336 = vpack.c.b16 %v311, %v310
    %v337 = vpack.c.b16 %v313, %v312
    %v338 = vpack.c.b16 %v315, %v314
    %v339 = vpack.c.b16 %v317, %v316
    %v340 = vpack.c.b16 %v319, %v318
    %v341 = vpack.c.b16 %v321, %v320
    %v342 = vpack.c.b16 %v323, %v322
    %v343 = vpack.c.b16 %v325, %v324
    %v344 = vpack.c.b16 %v327, %v326
    %v345 = vpack.c.b16 %v329, %v328
    %v354 = vunpack.c.l.b16 %v66
    %v355 = vunpack.c.l.b16 %v67
    %v356 = vunpack.c.l.b16 %v68
    %v357 = vunpack.c.l.b16 %v69
    %v358 = vunpack.c.l.b16 %v70
    %v359 = vunpack.c.l.b16 %v71
    %v360 = vunpack.c.l.b16 %v72
    %v361 = vunpack.c.l.b16 %v73
    %v362 = vpack.c.b16 %v355, %v354
    %v363 = vpack.c.b16 %v357, %v356
    %v364 = vpack.c.b16 %v359, %v358
    %v365 = vpack.c.b16 %v361, %v360
    %vm370 = vcmask 523264
    %v372 = vsel %vm370, %v330, 0
    %v375 = vsel %vm370, %v331, 0
    %v378 = vsel %vm370, %v332, 0
    %v381 = vsel %vm370, %v333, 0
    %v384 = vsel %vm370, %v334, 0
    %v387 = vsel %vm370, %v335, 0
    %v390 = vsel %vm370, %v336, 0
    %v393 = vsel %vm370, %v337, 0
    %v396 = vsel %vm370, %v338, 0
    %v399 = vsel %vm370, %v339, 0
    %v402 = vsel %vm370, %v340, 0
    %v405 = vsel %vm370, %v341, 0
    %v408 = vsel %vm370, %v342, 0
    %v411 = vsel %vm370, %v343, 0
    %v414 = vsel %vm370, %v344, 0
    %v417 = vsel %vm370, %v345, 0
    %419 = vmatprep.subr.bf16.mxu0 0
    %420 = vmatpush1.bf16.msra.mxu0 %v362
    %421 = vmatprep.subr.bf16.mxu0 0
    %422 = vmatpush1.bf16.msra.mxu0 %v363
    %423 = vmatprep.subr.bf16.mxu0 0
    %424 = vmatpush1.bf16.msra.mxu0 %v364
    %425 = vmatprep.subr.bf16.mxu0 0
    %426 = vmatpush1.bf16.msra.mxu0 %v365
    %427 = vmatprep.subr.bf16.mxu0 0
    %428 = vmatpush1.bf16.msra.mxu0 0
    %429 = vmatprep.subr.bf16.mxu0 0
    %430 = vmatpush1.bf16.msra.mxu0 0
    %431 = vmatprep.subr.bf16.mxu0 0
    %432 = vmatpush1.bf16.msra.mxu0 0
    %433 = vmatprep.subr.bf16.mxu0 0
    %434 = vmatpush1.bf16.msra.mxu0 0
    %435 = vmatprep.subr.bf16.mxu0 0
    %436 = vmatpush1.bf16.msra.mxu0 0
    %437 = vmatprep.subr.bf16.mxu0 0
    %438 = vmatpush1.bf16.msra.mxu0 0
    %439 = vmatprep.subr.bf16.mxu0 0
    %440 = vmatpush1.bf16.msra.mxu0 0
    %441 = vmatprep.subr.bf16.mxu0 0
    %442 = vmatpush1.bf16.msra.mxu0 0
    %443 = vmatprep.subr.bf16.mxu0 0
    %444 = vmatpush1.bf16.msra.mxu0 0
    %445 = vmatprep.subr.bf16.mxu0 0
    %446 = vmatpush1.bf16.msra.mxu0 0
    %447 = vmatprep.subr.bf16.mxu0 0
    %448 = vmatpush1.bf16.msra.mxu0 0
    %449 = vmatprep.subr.bf16.mxu0 0
    %450 = vmatpush1.bf16.msra.mxu0 0
    %451 = vmatprep.mubr.bf16.mxu0 0
    %452 = vmatmul.mubr.bf16.gmra.mrb[0].mxu0 %v372
    %v453 = vpop.f32.mrb[0].mxu0
    %v454 = vadd.f32 %v109, %v453
    %v455 = vpop.f32.mrb[0].mxu0
    %v456 = vpop.f32.mrb[0].mxu0
    %v457 = vadd.f32 %v114, %v456
    %v458 = vpop.f32.mrb[0].mxu0
    %459 = vmatprep.mubr.bf16.mxu0 0
    %460 = vmatmul.mubr.bf16.gmra.mrb[0].mxu0 %v375
    %v461 = vpop.f32.mrb[0].mxu0
    %v462 = vadd.f32 %v119, %v461
    %v463 = vpop.f32.mrb[0].mxu0
    %v464 = vpop.f32.mrb[0].mxu0
    %v465 = vadd.f32 %v124, %v464
    %v466 = vpop.f32.mrb[0].mxu0
    %467 = vmatprep.mubr.bf16.mxu0 0
    %468 = vmatmul.mubr.bf16.gmra.mrb[0].mxu0 %v378
    %v469 = vpop.f32.mrb[0].mxu0
    %v470 = vadd.f32 %v129, %v469
    %v471 = vpop.f32.mrb[0].mxu0
    %v472 = vpop.f32.mrb[0].mxu0
    %v473 = vadd.f32 %v134, %v472
    %v474 = vpop.f32.mrb[0].mxu0
    %475 = vmatprep.mubr.bf16.mxu0 0
    %476 = vmatmul.mubr.bf16.gmra.mrb[0].mxu0 %v381
    %v477 = vpop.f32.mrb[0].mxu0
    %v478 = vadd.f32 %v139, %v477
    %v479 = vpop.f32.mrb[0].mxu0
    %v480 = vpop.f32.mrb[0].mxu0
    %v481 = vadd.f32 %v144, %v480
    %v482 = vpop.f32.mrb[0].mxu0
    %483 = vmatprep.mubr.bf16.mxu0 0
    %484 = vmatmul.mubr.bf16.gmra.mrb[0].mxu0 %v384
    %v485 = vpop.f32.mrb[0].mxu0
    %v486 = vadd.f32 %v149, %v485
    %v487 = vpop.f32.mrb[0].mxu0
    %v488 = vpop.f32.mrb[0].mxu0
    %v489 = vadd.f32 %v154, %v488
    %v490 = vpop.f32.mrb[0].mxu0
    %491 = vmatprep.mubr.bf16.mxu0 0
    %492 = vmatmul.mubr.bf16.gmra.mrb[0].mxu0 %v387
    %v493 = vpop.f32.mrb[0].mxu0
    %v494 = vadd.f32 %v159, %v493
    %v495 = vpop.f32.mrb[0].mxu0
    %v496 = vpop.f32.mrb[0].mxu0
    %v497 = vadd.f32 %v164, %v496
    %v498 = vpop.f32.mrb[0].mxu0
    %499 = vmatprep.mubr.bf16.mxu0 0
    %500 = vmatmul.mubr.bf16.gmra.mrb[0].mxu0 %v390
    %v501 = vpop.f32.mrb[0].mxu0
    %v502 = vadd.f32 %v169, %v501
    %v503 = vpop.f32.mrb[0].mxu0
    %v504 = vpop.f32.mrb[0].mxu0
    %v505 = vadd.f32 %v174, %v504
    %v506 = vpop.f32.mrb[0].mxu0
    %507 = vmatprep.mubr.bf16.mxu0 0
    %508 = vmatmul.mubr.bf16.gmra.mrb[0].mxu0 %v393
    %v509 = vpop.f32.mrb[0].mxu0
    %v510 = vadd.f32 %v179, %v509
    %v511 = vpop.f32.mrb[0].mxu0
    %v512 = vpop.f32.mrb[0].mxu0
    %v513 = vadd.f32 %v184, %v512
    %v514 = vpop.f32.mrb[0].mxu0
    %515 = vmatprep.mubr.bf16.mxu0 0
    %516 = vmatmul.mubr.bf16.gmra.mrb[0].mxu0 %v396
    %v517 = vpop.f32.mrb[0].mxu0
    %v518 = vadd.f32 %v189, %v517
    %v519 = vpop.f32.mrb[0].mxu0
    %v520 = vpop.f32.mrb[0].mxu0
    %v521 = vadd.f32 %v194, %v520
    %v522 = vpop.f32.mrb[0].mxu0
    %523 = vmatprep.mubr.bf16.mxu0 0
    %524 = vmatmul.mubr.bf16.gmra.mrb[0].mxu0 %v399
    %v525 = vpop.f32.mrb[0].mxu0
    %v526 = vadd.f32 %v199, %v525
    %v527 = vpop.f32.mrb[0].mxu0
    %v528 = vpop.f32.mrb[0].mxu0
    %v529 = vadd.f32 %v204, %v528
    %v530 = vpop.f32.mrb[0].mxu0
    %531 = vmatprep.mubr.bf16.mxu0 0
    %532 = vmatmul.mubr.bf16.gmra.mrb[0].mxu0 %v402
    %v533 = vpop.f32.mrb[0].mxu0
    %v534 = vadd.f32 %v209, %v533
    %v535 = vpop.f32.mrb[0].mxu0
    %v536 = vpop.f32.mrb[0].mxu0
    %v537 = vadd.f32 %v214, %v536
    %v538 = vpop.f32.mrb[0].mxu0
    %539 = vmatprep.mubr.bf16.mxu0 0
    %540 = vmatmul.mubr.bf16.gmra.mrb[0].mxu0 %v405
    %v541 = vpop.f32.mrb[0].mxu0
    %v542 = vadd.f32 %v219, %v541
    %v543 = vpop.f32.mrb[0].mxu0
    %v544 = vpop.f32.mrb[0].mxu0
    %v545 = vadd.f32 %v224, %v544
    %v546 = vpop.f32.mrb[0].mxu0
    %547 = vmatprep.mubr.bf16.mxu0 0
    %548 = vmatmul.mubr.bf16.gmra.mrb[0].mxu0 %v408
    %v549 = vpop.f32.mrb[0].mxu0
    %v550 = vadd.f32 %v229, %v549
    %v551 = vpop.f32.mrb[0].mxu0
    %v552 = vpop.f32.mrb[0].mxu0
    %v553 = vadd.f32 %v234, %v552
    %v554 = vpop.f32.mrb[0].mxu0
    %555 = vmatprep.mubr.bf16.mxu0 0
    %556 = vmatmul.mubr.bf16.gmra.mrb[0].mxu0 %v411
    %v557 = vpop.f32.mrb[0].mxu0
    %v558 = vadd.f32 %v239, %v557
    %v559 = vpop.f32.mrb[0].mxu0
    %v560 = vpop.f32.mrb[0].mxu0
    %v561 = vadd.f32 %v244, %v560
    %v562 = vpop.f32.mrb[0].mxu0
    %563 = vmatprep.mubr.bf16.mxu0 0
    %564 = vmatmul.mubr.bf16.gmra.mrb[0].mxu0 %v414
    %v565 = vpop.f32.mrb[0].mxu0
    %v566 = vadd.f32 %v249, %v565
    %v567 = vpop.f32.mrb[0].mxu0
    %v568 = vpop.f32.mrb[0].mxu0
    %v569 = vadd.f32 %v254, %v568
    %v570 = vpop.f32.mrb[0].mxu0
    %571 = vmatprep.mubr.bf16.mxu0 0
    %572 = vmatmul.mubr.bf16.gmra.mrb[0].mxu0 %v417
    %v573 = vpop.f32.mrb[0].mxu0
    %v574 = vadd.f32 %v259, %v573
    %v575 = vpop.f32.mrb[0].mxu0
    %v576 = vpop.f32.mrb[0].mxu0
    %v577 = vadd.f32 %v264, %v576
    %v578 = vpop.f32.mrb[0].mxu0
    %579 = vdwg.mxu0
    %v580 = vmax.f32 %v454, 0.0
    %v581 = vmax.f32 %v457, 0.0
    %v582 = vmax.f32 %v462, 0.0
    %v583 = vmax.f32 %v465, 0.0
    %v584 = vmax.f32 %v470, 0.0
    %v585 = vmax.f32 %v473, 0.0
    %v586 = vmax.f32 %v478, 0.0
    %v587 = vmax.f32 %v481, 0.0
    %v588 = vmax.f32 %v486, 0.0
    %v589 = vmax.f32 %v489, 0.0
    %v590 = vmax.f32 %v494, 0.0
    %v591 = vmax.f32 %v497, 0.0
    %v592 = vmax.f32 %v502, 0.0
    %v593 = vmax.f32 %v505, 0.0
    %v594 = vmax.f32 %v510, 0.0
    %v595 = vmax.f32 %v513, 0.0
    %v596 = vmax.f32 %v518, 0.0
    %v597 = vmax.f32 %v521, 0.0
    %v598 = vmax.f32 %v526, 0.0
    %v599 = vmax.f32 %v529, 0.0
    %v600 = vmax.f32 %v534, 0.0
    %v601 = vmax.f32 %v537, 0.0
    %v602 = vmax.f32 %v542, 0.0
    %v603 = vmax.f32 %v545, 0.0
    %v604 = vmax.f32 %v550, 0.0
    %v605 = vmax.f32 %v553, 0.0
    %v606 = vmax.f32 %v558, 0.0
    %v607 = vmax.f32 %v561, 0.0
    %v608 = vmax.f32 %v566, 0.0
    %v609 = vmax.f32 %v569, 0.0
    %v610 = vmax.f32 %v574, 0.0
    %v611 = vmax.f32 %v577, 0.0
    %v612 = vld [vmem:[%s3] sm:$0xff]
    %v613 = vld [vmem:[%s3 + $0x8] sm:$0xff]
    %v614 = vld [vmem:[%s3 + $0x10] sm:$0xff]
    %v615 = vld [vmem:[%s3 + $0x18] sm:$0xff]
    %v616 = vld [vmem:[%s3 + $0x20] sm:$0xff]
    %v617 = vld [vmem:[%s3 + $0x28] sm:$0xff]
    %v618 = vld [vmem:[%s3 + $0x30] sm:$0xff]
    %v619 = vld [vmem:[%s3 + $0x38] sm:$0xff]
    %v620 = vld [vmem:[%s3 + $0x40] sm:$0xff]
    %v621 = vld [vmem:[%s3 + $0x48] sm:$0xff]
    %v622 = vld [vmem:[%s3 + $0x50] sm:$0xff]
    %v623 = vld [vmem:[%s3 + $0x58] sm:$0xff]
    %v624 = vld [vmem:[%s3 + $0x60] sm:$0xff]
    %v625 = vld [vmem:[%s3 + $0x68] sm:$0xff]
    %v626 = vld [vmem:[%s3 + $0x70] sm:$0xff]
    %v627 = vld [vmem:[%s3 + $0x78] sm:$0xff]
    %v628 = vld [vmem:[%s3 + $0x80] sm:$0xff]
    %v629 = vld [vmem:[%s3 + $0x88] sm:$0xff]
    %v630 = vld [vmem:[%s3 + $0x90] sm:$0xff]
    %v631 = vld [vmem:[%s3 + $0x98] sm:$0xff]
    %v632 = vld [vmem:[%s3 + $0xa0] sm:$0xff]
    %v633 = vld [vmem:[%s3 + $0xa8] sm:$0xff]
    %v634 = vld [vmem:[%s3 + $0xb0] sm:$0xff]
    %v635 = vld [vmem:[%s3 + $0xb8] sm:$0xff]
    %v636 = vld [vmem:[%s3 + $0xc0] sm:$0xff]
    %v637 = vld [vmem:[%s3 + $0xc8] sm:$0xff]
    %v638 = vld [vmem:[%s3 + $0xd0] sm:$0xff]
    %v639 = vld [vmem:[%s3 + $0xd8] sm:$0xff]
    %v640 = vld [vmem:[%s3 + $0xe0] sm:$0xff]
    %v641 = vld [vmem:[%s3 + $0xe8] sm:$0xff]
    %v642 = vld [vmem:[%s3 + $0xf0] sm:$0xff]
    %v643 = vld [vmem:[%s3 + $0xf8] sm:$0xff]
    %v644 = vpack.c.bf16 %v581, %v580
    %v645 = vpack.c.bf16 %v583, %v582
    %v646 = vpack.c.bf16 %v585, %v584
    %v647 = vpack.c.bf16 %v587, %v586
    %v648 = vpack.c.bf16 %v589, %v588
    %v649 = vpack.c.bf16 %v591, %v590
    %v650 = vpack.c.bf16 %v593, %v592
    %v651 = vpack.c.bf16 %v595, %v594
    %v652 = vpack.c.bf16 %v597, %v596
    %v653 = vpack.c.bf16 %v599, %v598
    %v654 = vpack.c.bf16 %v601, %v600
    %v655 = vpack.c.bf16 %v603, %v602
    %v656 = vpack.c.bf16 %v605, %v604
    %v657 = vpack.c.bf16 %v607, %v606
    %v658 = vpack.c.bf16 %v609, %v608
    %v659 = vpack.c.bf16 %v611, %v610
    %v660 = vld [vmem:[%s4] sm:$0xff]
    %v661 = vld [vmem:[%s4 + $0x8] sm:$0xff]
    %v662 = vld [vmem:[%s4 + $0x10] sm:$0xff]
    %v663 = vld [vmem:[%s4 + $0x18] sm:$0xff]
    %v664 = vld [vmem:[%s4 + $0x20] sm:$0xff]
    %v665 = vld [vmem:[%s4 + $0x28] sm:$0xff]
    %v666 = vld [vmem:[%s4 + $0x30] sm:$0xff]
    %v667 = vld [vmem:[%s4 + $0x38] sm:$0xff]
    %v668 = vld [vmem:[%s4 + $0x40] sm:$0xff]
    %v669 = vld [vmem:[%s4 + $0x48] sm:$0xff]
    %v670 = vld [vmem:[%s4 + $0x50] sm:$0xff]
    %v671 = vld [vmem:[%s4 + $0x58] sm:$0xff]
    %v672 = vld [vmem:[%s4 + $0x60] sm:$0xff]
    %v673 = vld [vmem:[%s4 + $0x68] sm:$0xff]
    %v674 = vld [vmem:[%s4 + $0x70] sm:$0xff]
    %v675 = vld [vmem:[%s4 + $0x78] sm:$0xff]
    %v676 = vld [vmem:[%s4 + $0x80] sm:$0xff]
    %v677 = vld [vmem:[%s4 + $0x88] sm:$0xff]
    %v678 = vld [vmem:[%s4 + $0x90] sm:$0xff]
    %v679 = vld [vmem:[%s4 + $0x98] sm:$0xff]
    %v680 = vld [vmem:[%s4 + $0xa0] sm:$0xff]
    %v681 = vld [vmem:[%s4 + $0xa8] sm:$0xff]
    %v682 = vld [vmem:[%s4 + $0xb0] sm:$0xff]
    %v683 = vld [vmem:[%s4 + $0xb8] sm:$0xff]
    %v684 = vld [vmem:[%s4 + $0xc0] sm:$0xff]
    %v685 = vld [vmem:[%s4 + $0xc8] sm:$0xff]
    %v686 = vld [vmem:[%s4 + $0xd0] sm:$0xff]
    %v687 = vld [vmem:[%s4 + $0xd8] sm:$0xff]
    %v688 = vld [vmem:[%s4 + $0xe0] sm:$0xff]
    %v689 = vld [vmem:[%s4 + $0xe8] sm:$0xff]
    %v690 = vld [vmem:[%s4 + $0xf0] sm:$0xff]
    %v691 = vld [vmem:[%s4 + $0xf8] sm:$0xff]
    %693 = vset.pattern.permute.xlu0 0
    %694 = vperm.xlu0 %693, %v660
    %v695 = vpop.permute.xlu0 %694
    %698 = vset.pattern.permute.xlu0 0
    %699 = vperm.xlu0 %698, %v661
    %v700 = vpop.permute.xlu0 %699
    %703 = vset.pattern.permute.xlu0 0
    %704 = vperm.xlu0 %703, %v662
    %v705 = vpop.permute.xlu0 %704
    %708 = vset.pattern.permute.xlu0 0
    %709 = vperm.xlu0 %708, %v663
    %v710 = vpop.permute.xlu0 %709
    %713 = vset.pattern.permute.xlu0 0
    %714 = vperm.xlu0 %713, %v664
    %v715 = vpop.permute.xlu0 %714
    %718 = vset.pattern.permute.xlu0 0
    %719 = vperm.xlu0 %718, %v665
    %v720 = vpop.permute.xlu0 %719
    %723 = vset.pattern.permute.xlu0 0
    %724 = vperm.xlu0 %723, %v666
    %v725 = vpop.permute.xlu0 %724
    %728 = vset.pattern.permute.xlu0 0
    %729 = vperm.xlu0 %728, %v667
    %v730 = vpop.permute.xlu0 %729
    %733 = vset.pattern.permute.xlu0 0
    %734 = vperm.xlu0 %733, %v668
    %v735 = vpop.permute.xlu0 %734
    %738 = vset.pattern.permute.xlu0 0
    %739 = vperm.xlu0 %738, %v669
    %v740 = vpop.permute.xlu0 %739
    %743 = vset.pattern.permute.xlu0 0
    %744 = vperm.xlu0 %743, %v670
    %v745 = vpop.permute.xlu0 %744
    %748 = vset.pattern.permute.xlu0 0
    %749 = vperm.xlu0 %748, %v671
    %v750 = vpop.permute.xlu0 %749
    %753 = vset.pattern.permute.xlu0 0
    %754 = vperm.xlu0 %753, %v672
    %v755 = vpop.permute.xlu0 %754
    %758 = vset.pattern.permute.xlu0 0
    %759 = vperm.xlu0 %758, %v673
    %v760 = vpop.permute.xlu0 %759
    %763 = vset.pattern.permute.xlu0 0
    %764 = vperm.xlu0 %763, %v674
    %v765 = vpop.permute.xlu0 %764
    %768 = vset.pattern.permute.xlu0 0
    %769 = vperm.xlu0 %768, %v675
    %v770 = vpop.permute.xlu0 %769
    %773 = vset.pattern.permute.xlu0 0
    %774 = vperm.xlu0 %773, %v676
    %v775 = vpop.permute.xlu0 %774
    %778 = vset.pattern.permute.xlu0 0
    %779 = vperm.xlu0 %778, %v677
    %v780 = vpop.permute.xlu0 %779
    %783 = vset.pattern.permute.xlu0 0
    %784 = vperm.xlu0 %783, %v678
    %v785 = vpop.permute.xlu0 %784
    %788 = vset.pattern.permute.xlu0 0
    %789 = vperm.xlu0 %788, %v679
    %v790 = vpop.permute.xlu0 %789
    %793 = vset.pattern.permute.xlu0 0
    %794 = vperm.xlu0 %793, %v680
    %v795 = vpop.permute.xlu0 %794
    %798 = vset.pattern.permute.xlu0 0
    %799 = vperm.xlu0 %798, %v681
    %v800 = vpop.permute.xlu0 %799
    %803 = vset.pattern.permute.xlu0 0
    %804 = vperm.xlu0 %803, %v682
    %v805 = vpop.permute.xlu0 %804
    %808 = vset.pattern.permute.xlu0 0
    %809 = vperm.xlu0 %808, %v683
    %v810 = vpop.permute.xlu0 %809
    %813 = vset.pattern.permute.xlu0 0
    %814 = vperm.xlu0 %813, %v684
    %v815 = vpop.permute.xlu0 %814
    %818 = vset.pattern.permute.xlu0 0
    %819 = vperm.xlu0 %818, %v685
    %v820 = vpop.permute.xlu0 %819
    %823 = vset.pattern.permute.xlu0 0
    %824 = vperm.xlu0 %823, %v686
    %v825 = vpop.permute.xlu0 %824
    %828 = vset.pattern.permute.xlu0 0
    %829 = vperm.xlu0 %828, %v687
    %v830 = vpop.permute.xlu0 %829
    %833 = vset.pattern.permute.xlu0 0
    %834 = vperm.xlu0 %833, %v688
    %v835 = vpop.permute.xlu0 %834
    %838 = vset.pattern.permute.xlu0 0
    %839 = vperm.xlu0 %838, %v689
    %v840 = vpop.permute.xlu0 %839
    %843 = vset.pattern.permute.xlu0 0
    %844 = vperm.xlu0 %843, %v690
    %v845 = vpop.permute.xlu0 %844
    %848 = vset.pattern.permute.xlu0 0
    %849 = vperm.xlu0 %848, %v691
    %v850 = vpop.permute.xlu0 %849
    %v884 = vunpack.c.l.b16 %v612
    %v885 = vunpack.c.h.b16 %v612
    %v886 = vunpack.c.l.b16 %v613
    %v887 = vunpack.c.h.b16 %v613
    %v888 = vunpack.c.l.b16 %v614
    %v889 = vunpack.c.h.b16 %v614
    %v890 = vunpack.c.l.b16 %v615
    %v891 = vunpack.c.h.b16 %v615
    %v892 = vunpack.c.l.b16 %v616
    %v893 = vunpack.c.h.b16 %v616
    %v894 = vunpack.c.l.b16 %v617
    %v895 = vunpack.c.h.b16 %v617
    %v896 = vunpack.c.l.b16 %v618
    %v897 = vunpack.c.h.b16 %v618
    %v898 = vunpack.c.l.b16 %v619
    %v899 = vunpack.c.h.b16 %v619
    %v900 = vunpack.c.l.b16 %v620
    %v901 = vunpack.c.h.b16 %v620
    %v902 = vunpack.c.l.b16 %v621
    %v903 = vunpack.c.h.b16 %v621
    %v904 = vunpack.c.l.b16 %v622
    %v905 = vunpack.c.h.b16 %v622
    %v906 = vunpack.c.l.b16 %v623
    %v907 = vunpack.c.h.b16 %v623
    %v908 = vunpack.c.l.b16 %v624
    %v909 = vunpack.c.h.b16 %v624
    %v910 = vunpack.c.l.b16 %v625
    %v911 = vunpack.c.h.b16 %v625
    %v912 = vunpack.c.l.b16 %v626
    %v913 = vunpack.c.h.b16 %v626
    %v914 = vunpack.c.l.b16 %v627
    %v915 = vunpack.c.h.b16 %v627
    %v916 = vunpack.c.l.b16 %v628
    %v917 = vunpack.c.h.b16 %v628
    %v918 = vunpack.c.l.b16 %v629
    %v919 = vunpack.c.h.b16 %v629
    %v920 = vunpack.c.l.b16 %v630
    %v921 = vunpack.c.h.b16 %v630
    %v922 = vunpack.c.l.b16 %v631
    %v923 = vunpack.c.h.b16 %v631
    %v924 = vunpack.c.l.b16 %v632
    %v925 = vunpack.c.h.b16 %v632
    %v926 = vunpack.c.l.b16 %v633
    %v927 = vunpack.c.h.b16 %v633
    %v928 = vunpack.c.l.b16 %v634
    %v929 = vunpack.c.h.b16 %v634
    %v930 = vunpack.c.l.b16 %v635
    %v931 = vunpack.c.h.b16 %v635
    %v932 = vunpack.c.l.b16 %v636
    %v933 = vunpack.c.h.b16 %v636
    %v934 = vunpack.c.l.b16 %v637
    %v935 = vunpack.c.h.b16 %v637
    %v936 = vunpack.c.l.b16 %v638
    %v937 = vunpack.c.h.b16 %v638
    %v938 = vunpack.c.l.b16 %v639
    %v939 = vunpack.c.h.b16 %v639
    %v940 = vunpack.c.l.b16 %v640
    %v941 = vunpack.c.h.b16 %v640
    %v942 = vunpack.c.l.b16 %v641
    %v943 = vunpack.c.h.b16 %v641
    %v944 = vunpack.c.l.b16 %v642
    %v945 = vunpack.c.h.b16 %v642
    %v946 = vunpack.c.l.b16 %v643
    %v947 = vunpack.c.h.b16 %v643
    %v948 = vpack.c.b16 %v886, %v884
    %v949 = vpack.c.b16 %v887, %v885
    %v950 = vpack.c.b16 %v890, %v888
    %v951 = vpack.c.b16 %v891, %v889
    %v952 = vpack.c.b16 %v894, %v892
    %v953 = vpack.c.b16 %v895, %v893
    %v954 = vpack.c.b16 %v898, %v896
    %v955 = vpack.c.b16 %v899, %v897
    %v956 = vpack.c.b16 %v902, %v900
    %v957 = vpack.c.b16 %v903, %v901
    %v958 = vpack.c.b16 %v906, %v904
    %v959 = vpack.c.b16 %v907, %v905
    %v960 = vpack.c.b16 %v910, %v908
    %v961 = vpack.c.b16 %v911, %v909
    %v962 = vpack.c.b16 %v914, %v912
    %v963 = vpack.c.b16 %v915, %v913
    %v964 = vpack.c.b16 %v918, %v916
    %v965 = vpack.c.b16 %v919, %v917
    %v966 = vpack.c.b16 %v922, %v920
    %v967 = vpack.c.b16 %v923, %v921
    %v968 = vpack.c.b16 %v926, %v924
    %v969 = vpack.c.b16 %v927, %v925
    %v970 = vpack.c.b16 %v930, %v928
    %v971 = vpack.c.b16 %v931, %v929
    %v972 = vpack.c.b16 %v934, %v932
    %v973 = vpack.c.b16 %v935, %v933
    %v974 = vpack.c.b16 %v938, %v936
    %v975 = vpack.c.b16 %v939, %v937
    %v976 = vpack.c.b16 %v942, %v940
    %v977 = vpack.c.b16 %v943, %v941
    %v978 = vpack.c.b16 %v946, %v944
    %v979 = vpack.c.b16 %v947, %v945
    %1012 = vmatprep.subr.bf16.mxu0 0
    %1013 = vmatpush1.bf16.msra.mxu0 %v644
    %1014 = vmatprep.subr.bf16.mxu0 0
    %1015 = vmatpush1.bf16.msra.mxu0 %v645
    %1016 = vmatprep.subr.bf16.mxu0 0
    %1017 = vmatpush1.bf16.msra.mxu0 %v646
    %1018 = vmatprep.subr.bf16.mxu0 0
    %1019 = vmatpush1.bf16.msra.mxu0 %v647
    %1020 = vmatprep.subr.bf16.mxu0 0
    %1021 = vmatpush1.bf16.msra.mxu0 %v648
    %1022 = vmatprep.subr.bf16.mxu0 0
    %1023 = vmatpush1.bf16.msra.mxu0 %v649
    %1024 = vmatprep.subr.bf16.mxu0 0
    %1025 = vmatpush1.bf16.msra.mxu0 %v650
    %1026 = vmatprep.subr.bf16.mxu0 0
    %1027 = vmatpush1.bf16.msra.mxu0 %v651
    %1028 = vmatprep.subr.bf16.mxu0 0
    %1029 = vmatpush1.bf16.msra.mxu0 %v652
    %1030 = vmatprep.subr.bf16.mxu0 0
    %1031 = vmatpush1.bf16.msra.mxu0 %v653
    %1032 = vmatprep.subr.bf16.mxu0 0
    %1033 = vmatpush1.bf16.msra.mxu0 %v654
    %1034 = vmatprep.subr.bf16.mxu0 0
    %1035 = vmatpush1.bf16.msra.mxu0 %v655
    %1036 = vmatprep.subr.bf16.mxu0 0
    %1037 = vmatpush1.bf16.msra.mxu0 %v656
    %1038 = vmatprep.subr.bf16.mxu0 0
    %1039 = vmatpush1.bf16.msra.mxu0 %v657
    %1040 = vmatprep.subr.bf16.mxu0 0
    %1041 = vmatpush1.bf16.msra.mxu0 %v658
    %1042 = vmatprep.subr.bf16.mxu0 0
    %1043 = vmatpush1.bf16.msra.mxu0 %v659
    %1044 = vmatprep.mubr.bf16.mxu0 %v949
    %1045 = vmatmul.mubr.bf16.gmra.mrb[0].mxu0 %v948
    %v1046 = vpop.f32.mrb[0].mxu0
    %v1047 = vadd.f32 %v695, %v1046
    %v1048 = vpop.f32.mrb[0].mxu0
    %v1049 = vpop.f32.mrb[0].mxu0
    %v1050 = vadd.f32 %v700, %v1049
    %v1051 = vpop.f32.mrb[0].mxu0
    %1052 = vmatprep.mubr.bf16.mxu0 %v951
    %1053 = vmatmul.mubr.bf16.gmra.mrb[0].mxu0 %v950
    %v1054 = vpop.f32.mrb[0].mxu0
    %v1055 = vadd.f32 %v705, %v1054
    %v1056 = vpop.f32.mrb[0].mxu0
    %v1057 = vpop.f32.mrb[0].mxu0
    %v1058 = vadd.f32 %v710, %v1057
    %v1059 = vpop.f32.mrb[0].mxu0
    %1060 = vmatprep.mubr.bf16.mxu0 %v953
    %1061 = vmatmul.mubr.bf16.gmra.mrb[0].mxu0 %v952
    %v1062 = vpop.f32.mrb[0].mxu0
    %v1063 = vadd.f32 %v715, %v1062
    %v1064 = vpop.f32.mrb[0].mxu0
    %v1065 = vpop.f32.mrb[0].mxu0
    %v1066 = vadd.f32 %v720, %v1065
    %v1067 = vpop.f32.mrb[0].mxu0
    %1068 = vmatprep.mubr.bf16.mxu0 %v955
    %1069 = vmatmul.mubr.bf16.gmra.mrb[0].mxu0 %v954
    %v1070 = vpop.f32.mrb[0].mxu0
    %v1071 = vadd.f32 %v725, %v1070
    %v1072 = vpop.f32.mrb[0].mxu0
    %v1073 = vpop.f32.mrb[0].mxu0
    %v1074 = vadd.f32 %v730, %v1073
    %v1075 = vpop.f32.mrb[0].mxu0
    %1076 = vmatprep.mubr.bf16.mxu0 %v957
    %1077 = vmatmul.mubr.bf16.gmra.mrb[0].mxu0 %v956
    %v1078 = vpop.f32.mrb[0].mxu0
    %v1079 = vadd.f32 %v735, %v1078
    %v1080 = vpop.f32.mrb[0].mxu0
    %v1081 = vpop.f32.mrb[0].mxu0
    %v1082 = vadd.f32 %v740, %v1081
    %v1083 = vpop.f32.mrb[0].mxu0
    %1084 = vmatprep.mubr.bf16.mxu0 %v959
    %1085 = vmatmul.mubr.bf16.gmra.mrb[0].mxu0 %v958
    %v1086 = vpop.f32.mrb[0].mxu0
    %v1087 = vadd.f32 %v745, %v1086
    %v1088 = vpop.f32.mrb[0].mxu0
    %v1089 = vpop.f32.mrb[0].mxu0
    %v1090 = vadd.f32 %v750, %v1089
    %v1091 = vpop.f32.mrb[0].mxu0
    %1092 = vmatprep.mubr.bf16.mxu0 %v961
    %1093 = vmatmul.mubr.bf16.gmra.mrb[0].mxu0 %v960
    %v1094 = vpop.f32.mrb[0].mxu0
    %v1095 = vadd.f32 %v755, %v1094
    %v1096 = vpop.f32.mrb[0].mxu0
    %v1097 = vpop.f32.mrb[0].mxu0
    %v1098 = vadd.f32 %v760, %v1097
    %v1099 = vpop.f32.mrb[0].mxu0
    %1100 = vmatprep.mubr.bf16.mxu0 %v963
    %1101 = vmatmul.mubr.bf16.gmra.mrb[0].mxu0 %v962
    %v1102 = vpop.f32.mrb[0].mxu0
    %v1103 = vadd.f32 %v765, %v1102
    %v1104 = vpop.f32.mrb[0].mxu0
    %v1105 = vpop.f32.mrb[0].mxu0
    %v1106 = vadd.f32 %v770, %v1105
    %v1107 = vpop.f32.mrb[0].mxu0
    %1108 = vmatprep.mubr.bf16.mxu0 %v965
    %1109 = vmatmul.mubr.bf16.gmra.mrb[0].mxu0 %v964
    %v1110 = vpop.f32.mrb[0].mxu0
    %v1111 = vadd.f32 %v775, %v1110
    %v1112 = vpop.f32.mrb[0].mxu0
    %v1113 = vpop.f32.mrb[0].mxu0
    %v1114 = vadd.f32 %v780, %v1113
    %v1115 = vpop.f32.mrb[0].mxu0
    %1116 = vmatprep.mubr.bf16.mxu0 %v967
    %1117 = vmatmul.mubr.bf16.gmra.mrb[0].mxu0 %v966
    %v1118 = vpop.f32.mrb[0].mxu0
    %v1119 = vadd.f32 %v785, %v1118
    %v1120 = vpop.f32.mrb[0].mxu0
    %v1121 = vpop.f32.mrb[0].mxu0
    %v1122 = vadd.f32 %v790, %v1121
    %v1123 = vpop.f32.mrb[0].mxu0
    %1124 = vmatprep.mubr.bf16.mxu0 %v969
    %1125 = vmatmul.mubr.bf16.gmra.mrb[0].mxu0 %v968
    %v1126 = vpop.f32.mrb[0].mxu0
    %v1127 = vadd.f32 %v795, %v1126
    %v1128 = vpop.f32.mrb[0].mxu0
    %v1129 = vpop.f32.mrb[0].mxu0
    %v1130 = vadd.f32 %v800, %v1129
    %v1131 = vpop.f32.mrb[0].mxu0
    %1132 = vmatprep.mubr.bf16.mxu0 %v971
    %1133 = vmatmul.mubr.bf16.gmra.mrb[0].mxu0 %v970
    %v1134 = vpop.f32.mrb[0].mxu0
    %v1135 = vadd.f32 %v805, %v1134
    %v1136 = vpop.f32.mrb[0].mxu0
    %v1137 = vpop.f32.mrb[0].mxu0
    %v1138 = vadd.f32 %v810, %v1137
    %v1139 = vpop.f32.mrb[0].mxu0
    %1140 = vmatprep.mubr.bf16.mxu0 %v973
    %1141 = vmatmul.mubr.bf16.gmra.mrb[0].mxu0 %v972
    %v1142 = vpop.f32.mrb[0].mxu0
    %v1143 = vadd.f32 %v815, %v1142
    %v1144 = vpop.f32.mrb[0].mxu0
    %v1145 = vpop.f32.mrb[0].mxu0
    %v1146 = vadd.f32 %v820, %v1145
    %v1147 = vpop.f32.mrb[0].mxu0
    %1148 = vmatprep.mubr.bf16.mxu0 %v975
    %1149 = vmatmul.mubr.bf16.gmra.mrb[0].mxu0 %v974
    %v1150 = vpop.f32.mrb[0].mxu0
    %v1151 = vadd.f32 %v825, %v1150
    %v1152 = vpop.f32.mrb[0].mxu0
    %v1153 = vpop.f32.mrb[0].mxu0
    %v1154 = vadd.f32 %v830, %v1153
    %v1155 = vpop.f32.mrb[0].mxu0
    %1156 = vmatprep.mubr.bf16.mxu0 %v977
    %1157 = vmatmul.mubr.bf16.gmra.mrb[0].mxu0 %v976
    %v1158 = vpop.f32.mrb[0].mxu0
    %v1159 = vadd.f32 %v835, %v1158
    %v1160 = vpop.f32.mrb[0].mxu0
    %v1161 = vpop.f32.mrb[0].mxu0
    %v1162 = vadd.f32 %v840, %v1161
    %v1163 = vpop.f32.mrb[0].mxu0
    %1164 = vmatprep.mubr.bf16.mxu0 %v979
    %1165 = vmatmul.mubr.bf16.gmra.mrb[0].mxu0 %v978
    %v1166 = vpop.f32.mrb[0].mxu0
    %v1167 = vadd.f32 %v845, %v1166
    %v1168 = vpop.f32.mrb[0].mxu0
    %v1169 = vpop.f32.mrb[0].mxu0
    %v1170 = vadd.f32 %v850, %v1169
    %v1171 = vpop.f32.mrb[0].mxu0
    %1172 = vdwg.mxu0
    %v1173 = vmax.f32 %v1047, 0.0
    %v1174 = vmax.f32 %v1050, 0.0
    %v1175 = vmax.f32 %v1055, 0.0
    %v1176 = vmax.f32 %v1058, 0.0
    %v1177 = vmax.f32 %v1063, 0.0
    %v1178 = vmax.f32 %v1066, 0.0
    %v1179 = vmax.f32 %v1071, 0.0
    %v1180 = vmax.f32 %v1074, 0.0
    %v1181 = vmax.f32 %v1079, 0.0
    %v1182 = vmax.f32 %v1082, 0.0
    %v1183 = vmax.f32 %v1087, 0.0
    %v1184 = vmax.f32 %v1090, 0.0
    %v1185 = vmax.f32 %v1095, 0.0
    %v1186 = vmax.f32 %v1098, 0.0
    %v1187 = vmax.f32 %v1103, 0.0
    %v1188 = vmax.f32 %v1106, 0.0
    %v1189 = vmax.f32 %v1111, 0.0
    %v1190 = vmax.f32 %v1114, 0.0
    %v1191 = vmax.f32 %v1119, 0.0
    %v1192 = vmax.f32 %v1122, 0.0
    %v1193 = vmax.f32 %v1127, 0.0
    %v1194 = vmax.f32 %v1130, 0.0
    %v1195 = vmax.f32 %v1135, 0.0
    %v1196 = vmax.f32 %v1138, 0.0
    %v1197 = vmax.f32 %v1143, 0.0
    %v1198 = vmax.f32 %v1146, 0.0
    %v1199 = vmax.f32 %v1151, 0.0
    %v1200 = vmax.f32 %v1154, 0.0
    %v1201 = vmax.f32 %v1159, 0.0
    %v1202 = vmax.f32 %v1162, 0.0
    %v1203 = vmax.f32 %v1167, 0.0
    %v1204 = vmax.f32 %v1170, 0.0
    %v1205 = vld [vmem:[%s5] sm:$0xff]
    %v1206 = vld [vmem:[%s5 + $0x8] sm:$0xff]
    %v1207 = vld [vmem:[%s5 + $0x10] sm:$0xff]
    %v1208 = vld [vmem:[%s5 + $0x18] sm:$0xff]
    %v1209 = vld [vmem:[%s5 + $0x20] sm:$0xff]
    %v1210 = vld [vmem:[%s5 + $0x28] sm:$0xff]
    %v1211 = vld [vmem:[%s5 + $0x30] sm:$0xff]
    %v1212 = vld [vmem:[%s5 + $0x38] sm:$0xff]
    %v1213 = vld [vmem:[%s5 + $0x40] sm:$0xff]
    %v1214 = vld [vmem:[%s5 + $0x48] sm:$0xff]
    %v1215 = vld [vmem:[%s5 + $0x50] sm:$0xff]
    %v1216 = vld [vmem:[%s5 + $0x58] sm:$0xff]
    %v1217 = vld [vmem:[%s5 + $0x60] sm:$0xff]
    %v1218 = vld [vmem:[%s5 + $0x68] sm:$0xff]
    %v1219 = vld [vmem:[%s5 + $0x70] sm:$0xff]
    %v1220 = vld [vmem:[%s5 + $0x78] sm:$0xff]
    %v1221 = vpack.c.bf16 %v1174, %v1173
    %v1222 = vpack.c.bf16 %v1176, %v1175
    %v1223 = vpack.c.bf16 %v1178, %v1177
    %v1224 = vpack.c.bf16 %v1180, %v1179
    %v1225 = vpack.c.bf16 %v1182, %v1181
    %v1226 = vpack.c.bf16 %v1184, %v1183
    %v1227 = vpack.c.bf16 %v1186, %v1185
    %v1228 = vpack.c.bf16 %v1188, %v1187
    %v1229 = vpack.c.bf16 %v1190, %v1189
    %v1230 = vpack.c.bf16 %v1192, %v1191
    %v1231 = vpack.c.bf16 %v1194, %v1193
    %v1232 = vpack.c.bf16 %v1196, %v1195
    %v1233 = vpack.c.bf16 %v1198, %v1197
    %v1234 = vpack.c.bf16 %v1200, %v1199
    %v1235 = vpack.c.bf16 %v1202, %v1201
    %v1236 = vpack.c.bf16 %v1204, %v1203
    %v1237 = vld [vmem:[%s6] sm:$0xff]
    %v1238 = vld [vmem:[%s6 + $0x8] sm:$0xff]
    %v1239 = vld [vmem:[%s6 + $0x10] sm:$0xff]
    %v1240 = vld [vmem:[%s6 + $0x18] sm:$0xff]
    %v1241 = vld [vmem:[%s6 + $0x20] sm:$0xff]
    %v1242 = vld [vmem:[%s6 + $0x28] sm:$0xff]
    %v1243 = vld [vmem:[%s6 + $0x30] sm:$0xff]
    %v1244 = vld [vmem:[%s6 + $0x38] sm:$0xff]
    %v1245 = vld [vmem:[%s6 + $0x40] sm:$0xff]
    %v1246 = vld [vmem:[%s6 + $0x48] sm:$0xff]
    %v1247 = vld [vmem:[%s6 + $0x50] sm:$0xff]
    %v1248 = vld [vmem:[%s6 + $0x58] sm:$0xff]
    %v1249 = vld [vmem:[%s6 + $0x60] sm:$0xff]
    %v1250 = vld [vmem:[%s6 + $0x68] sm:$0xff]
    %v1251 = vld [vmem:[%s6 + $0x70] sm:$0xff]
    %v1252 = vld [vmem:[%s6 + $0x78] sm:$0xff]
    %1254 = vset.pattern.permute.xlu0 0
    %1255 = vperm.xlu0 %1254, %v1237
    %v1256 = vpop.permute.xlu0 %1255
    %1259 = vset.pattern.permute.xlu0 0
    %1260 = vperm.xlu0 %1259, %v1238
    %v1261 = vpop.permute.xlu0 %1260
    %1264 = vset.pattern.permute.xlu0 0
    %1265 = vperm.xlu0 %1264, %v1239
    %v1266 = vpop.permute.xlu0 %1265
    %1269 = vset.pattern.permute.xlu0 0
    %1270 = vperm.xlu0 %1269, %v1240
    %v1271 = vpop.permute.xlu0 %1270
    %1274 = vset.pattern.permute.xlu0 0
    %1275 = vperm.xlu0 %1274, %v1241
    %v1276 = vpop.permute.xlu0 %1275
    %1279 = vset.pattern.permute.xlu0 0
    %1280 = vperm.xlu0 %1279, %v1242
    %v1281 = vpop.permute.xlu0 %1280
    %1284 = vset.pattern.permute.xlu0 0
    %1285 = vperm.xlu0 %1284, %v1243
    %v1286 = vpop.permute.xlu0 %1285
    %1289 = vset.pattern.permute.xlu0 0
    %1290 = vperm.xlu0 %1289, %v1244
    %v1291 = vpop.permute.xlu0 %1290
    %1294 = vset.pattern.permute.xlu0 0
    %1295 = vperm.xlu0 %1294, %v1245
    %v1296 = vpop.permute.xlu0 %1295
    %1299 = vset.pattern.permute.xlu0 0
    %1300 = vperm.xlu0 %1299, %v1246
    %v1301 = vpop.permute.xlu0 %1300
    %1304 = vset.pattern.permute.xlu0 0
    %1305 = vperm.xlu0 %1304, %v1247
    %v1306 = vpop.permute.xlu0 %1305
    %1309 = vset.pattern.permute.xlu0 0
    %1310 = vperm.xlu0 %1309, %v1248
    %v1311 = vpop.permute.xlu0 %1310
    %1314 = vset.pattern.permute.xlu0 0
    %1315 = vperm.xlu0 %1314, %v1249
    %v1316 = vpop.permute.xlu0 %1315
    %1319 = vset.pattern.permute.xlu0 0
    %1320 = vperm.xlu0 %1319, %v1250
    %v1321 = vpop.permute.xlu0 %1320
    %1324 = vset.pattern.permute.xlu0 0
    %1325 = vperm.xlu0 %1324, %v1251
    %v1326 = vpop.permute.xlu0 %1325
    %1329 = vset.pattern.permute.xlu0 0
    %1330 = vperm.xlu0 %1329, %v1252
    %v1331 = vpop.permute.xlu0 %1330
    %v1349 = vunpack.c.l.b16 %v1205
    %v1350 = vunpack.c.h.b16 %v1205
    %v1351 = vunpack.c.l.b16 %v1206
    %v1352 = vunpack.c.h.b16 %v1206
    %v1353 = vunpack.c.l.b16 %v1207
    %v1354 = vunpack.c.h.b16 %v1207
    %v1355 = vunpack.c.l.b16 %v1208
    %v1356 = vunpack.c.h.b16 %v1208
    %v1357 = vunpack.c.l.b16 %v1209
    %v1358 = vunpack.c.h.b16 %v1209
    %v1359 = vunpack.c.l.b16 %v1210
    %v1360 = vunpack.c.h.b16 %v1210
    %v1361 = vunpack.c.l.b16 %v1211
    %v1362 = vunpack.c.h.b16 %v1211
    %v1363 = vunpack.c.l.b16 %v1212
    %v1364 = vunpack.c.h.b16 %v1212
    %v1365 = vunpack.c.l.b16 %v1213
    %v1366 = vunpack.c.h.b16 %v1213
    %v1367 = vunpack.c.l.b16 %v1214
    %v1368 = vunpack.c.h.b16 %v1214
    %v1369 = vunpack.c.l.b16 %v1215
    %v1370 = vunpack.c.h.b16 %v1215
    %v1371 = vunpack.c.l.b16 %v1216
    %v1372 = vunpack.c.h.b16 %v1216
    %v1373 = vunpack.c.l.b16 %v1217
    %v1374 = vunpack.c.h.b16 %v1217
    %v1375 = vunpack.c.l.b16 %v1218
    %v1376 = vunpack.c.h.b16 %v1218
    %v1377 = vunpack.c.l.b16 %v1219
    %v1378 = vunpack.c.h.b16 %v1219
    %v1379 = vunpack.c.l.b16 %v1220
    %v1380 = vunpack.c.h.b16 %v1220
    %v1381 = vpack.c.b16 %v1351, %v1349
    %v1382 = vpack.c.b16 %v1352, %v1350
    %v1383 = vpack.c.b16 %v1355, %v1353
    %v1384 = vpack.c.b16 %v1356, %v1354
    %v1385 = vpack.c.b16 %v1359, %v1357
    %v1386 = vpack.c.b16 %v1360, %v1358
    %v1387 = vpack.c.b16 %v1363, %v1361
    %v1388 = vpack.c.b16 %v1364, %v1362
    %v1389 = vpack.c.b16 %v1367, %v1365
    %v1390 = vpack.c.b16 %v1368, %v1366
    %v1391 = vpack.c.b16 %v1371, %v1369
    %v1392 = vpack.c.b16 %v1372, %v1370
    %v1393 = vpack.c.b16 %v1375, %v1373
    %v1394 = vpack.c.b16 %v1376, %v1374
    %v1395 = vpack.c.b16 %v1379, %v1377
    %v1396 = vpack.c.b16 %v1380, %v1378
    %1413 = vmatprep.subr.bf16.mxu0 0
    %1414 = vmatpush1.bf16.msra.mxu0 %v1221
    %1415 = vmatprep.subr.bf16.mxu0 0
    %1416 = vmatpush1.bf16.msra.mxu0 %v1222
    %1417 = vmatprep.subr.bf16.mxu0 0
    %1418 = vmatpush1.bf16.msra.mxu0 %v1223
    %1419 = vmatprep.subr.bf16.mxu0 0
    %1420 = vmatpush1.bf16.msra.mxu0 %v1224
    %1421 = vmatprep.subr.bf16.mxu0 0
    %1422 = vmatpush1.bf16.msra.mxu0 %v1225
    %1423 = vmatprep.subr.bf16.mxu0 0
    %1424 = vmatpush1.bf16.msra.mxu0 %v1226
    %1425 = vmatprep.subr.bf16.mxu0 0
    %1426 = vmatpush1.bf16.msra.mxu0 %v1227
    %1427 = vmatprep.subr.bf16.mxu0 0
    %1428 = vmatpush1.bf16.msra.mxu0 %v1228
    %1429 = vmatprep.subr.bf16.mxu0 0
    %1430 = vmatpush1.bf16.msra.mxu0 %v1229
    %1431 = vmatprep.subr.bf16.mxu0 0
    %1432 = vmatpush1.bf16.msra.mxu0 %v1230
    %1433 = vmatprep.subr.bf16.mxu0 0
    %1434 = vmatpush1.bf16.msra.mxu0 %v1231
    %1435 = vmatprep.subr.bf16.mxu0 0
    %1436 = vmatpush1.bf16.msra.mxu0 %v1232
    %1437 = vmatprep.subr.bf16.mxu0 0
    %1438 = vmatpush1.bf16.msra.mxu0 %v1233
    %1439 = vmatprep.subr.bf16.mxu0 0
    %1440 = vmatpush1.bf16.msra.mxu0 %v1234
    %1441 = vmatprep.subr.bf16.mxu0 0
    %1442 = vmatpush1.bf16.msra.mxu0 %v1235
    %1443 = vmatprep.subr.bf16.mxu0 0
    %1444 = vmatpush1.bf16.msra.mxu0 %v1236
    %1445 = vmatprep.mubr.bf16.mxu0 %v1382
    %1446 = vmatmul.mubr.bf16.gmra.mrb[0].mxu0 %v1381
    %v1447 = vpop.f32.mrb[0].mxu0
    %v1448 = vadd.f32 %v1256, %v1447
    %v1449 = vpop.f32.mrb[0].mxu0
    %v1450 = vpop.f32.mrb[0].mxu0
    %v1451 = vadd.f32 %v1261, %v1450
    %v1452 = vpop.f32.mrb[0].mxu0
    %1453 = vmatprep.mubr.bf16.mxu0 %v1384
    %1454 = vmatmul.mubr.bf16.gmra.mrb[0].mxu0 %v1383
    %v1455 = vpop.f32.mrb[0].mxu0
    %v1456 = vadd.f32 %v1266, %v1455
    %v1457 = vpop.f32.mrb[0].mxu0
    %v1458 = vpop.f32.mrb[0].mxu0
    %v1459 = vadd.f32 %v1271, %v1458
    %v1460 = vpop.f32.mrb[0].mxu0
    %1461 = vmatprep.mubr.bf16.mxu0 %v1386
    %1462 = vmatmul.mubr.bf16.gmra.mrb[0].mxu0 %v1385
    %v1463 = vpop.f32.mrb[0].mxu0
    %v1464 = vadd.f32 %v1276, %v1463
    %v1465 = vpop.f32.mrb[0].mxu0
    %v1466 = vpop.f32.mrb[0].mxu0
    %v1467 = vadd.f32 %v1281, %v1466
    %v1468 = vpop.f32.mrb[0].mxu0
    %1469 = vmatprep.mubr.bf16.mxu0 %v1388
    %1470 = vmatmul.mubr.bf16.gmra.mrb[0].mxu0 %v1387
    %v1471 = vpop.f32.mrb[0].mxu0
    %v1472 = vadd.f32 %v1286, %v1471
    %v1473 = vpop.f32.mrb[0].mxu0
    %v1474 = vpop.f32.mrb[0].mxu0
    %v1475 = vadd.f32 %v1291, %v1474
    %v1476 = vpop.f32.mrb[0].mxu0
    %1477 = vmatprep.mubr.bf16.mxu0 %v1390
    %1478 = vmatmul.mubr.bf16.gmra.mrb[0].mxu0 %v1389
    %v1479 = vpop.f32.mrb[0].mxu0
    %v1480 = vadd.f32 %v1296, %v1479
    %v1481 = vpop.f32.mrb[0].mxu0
    %v1482 = vpop.f32.mrb[0].mxu0
    %v1483 = vadd.f32 %v1301, %v1482
    %v1484 = vpop.f32.mrb[0].mxu0
    %1485 = vmatprep.mubr.bf16.mxu0 %v1392
    %1486 = vmatmul.mubr.bf16.gmra.mrb[0].mxu0 %v1391
    %v1487 = vpop.f32.mrb[0].mxu0
    %v1488 = vadd.f32 %v1306, %v1487
    %v1489 = vpop.f32.mrb[0].mxu0
    %v1490 = vpop.f32.mrb[0].mxu0
    %v1491 = vadd.f32 %v1311, %v1490
    %v1492 = vpop.f32.mrb[0].mxu0
    %1493 = vmatprep.mubr.bf16.mxu0 %v1394
    %1494 = vmatmul.mubr.bf16.gmra.mrb[0].mxu0 %v1393
    %v1495 = vpop.f32.mrb[0].mxu0
    %v1496 = vadd.f32 %v1316, %v1495
    %v1497 = vpop.f32.mrb[0].mxu0
    %v1498 = vpop.f32.mrb[0].mxu0
    %v1499 = vadd.f32 %v1321, %v1498
    %v1500 = vpop.f32.mrb[0].mxu0
    %1501 = vmatprep.mubr.bf16.mxu0 %v1396
    %1502 = vmatmul.mubr.bf16.gmra.mrb[0].mxu0 %v1395
    %v1503 = vpop.f32.mrb[0].mxu0
    %v1504 = vadd.f32 %v1326, %v1503
    %v1505 = vpop.f32.mrb[0].mxu0
    %v1506 = vpop.f32.mrb[0].mxu0
    %v1507 = vadd.f32 %v1331, %v1506
    %v1508 = vpop.f32.mrb[0].mxu0
    %1509 = vdwg.mxu0
    %v1510 = vmax.f32 %v1448, 0.0
    %v1511 = vmax.f32 %v1451, 0.0
    %v1512 = vmax.f32 %v1456, 0.0
    %v1513 = vmax.f32 %v1459, 0.0
    %v1514 = vmax.f32 %v1464, 0.0
    %v1515 = vmax.f32 %v1467, 0.0
    %v1516 = vmax.f32 %v1472, 0.0
    %v1517 = vmax.f32 %v1475, 0.0
    %v1518 = vmax.f32 %v1480, 0.0
    %v1519 = vmax.f32 %v1483, 0.0
    %v1520 = vmax.f32 %v1488, 0.0
    %v1521 = vmax.f32 %v1491, 0.0
    %v1522 = vmax.f32 %v1496, 0.0
    %v1523 = vmax.f32 %v1499, 0.0
    %v1524 = vmax.f32 %v1504, 0.0
    %v1525 = vmax.f32 %v1507, 0.0
    %v1526 = vld [vmem:[%s7] sm:$0xf]
    %v1527 = vpack.c.bf16 %v1511, %v1510
    %v1528 = vpack.c.bf16 %v1513, %v1512
    %v1529 = vpack.c.bf16 %v1515, %v1514
    %v1530 = vpack.c.bf16 %v1517, %v1516
    %v1531 = vpack.c.bf16 %v1519, %v1518
    %v1532 = vpack.c.bf16 %v1521, %v1520
    %v1533 = vpack.c.bf16 %v1523, %v1522
    %v1534 = vpack.c.bf16 %v1525, %v1524
    %v1535 = vld [vmem:[%s8] sm:$0xff]
    %1537 = vset.pattern.permute.xlu0 0
    %1538 = vperm.xlu0 %1537, %v1535
    %v1539 = vpop.permute.xlu0 %1538
    %1541 = vmatprep.subr.bf16.mxu0 0
    %1542 = vmatpush1.bf16.msra.mxu0 %v1527
    %1543 = vmatprep.subr.bf16.mxu0 0
    %1544 = vmatpush1.bf16.msra.mxu0 %v1528
    %1545 = vmatprep.subr.bf16.mxu0 0
    %1546 = vmatpush1.bf16.msra.mxu0 %v1529
    %1547 = vmatprep.subr.bf16.mxu0 0
    %1548 = vmatpush1.bf16.msra.mxu0 %v1530
    %1549 = vmatprep.subr.bf16.mxu0 0
    %1550 = vmatpush1.bf16.msra.mxu0 %v1531
    %1551 = vmatprep.subr.bf16.mxu0 0
    %1552 = vmatpush1.bf16.msra.mxu0 %v1532
    %1553 = vmatprep.subr.bf16.mxu0 0
    %1554 = vmatpush1.bf16.msra.mxu0 %v1533
    %1555 = vmatprep.subr.bf16.mxu0 0
    %1556 = vmatpush1.bf16.msra.mxu0 %v1534
    %1557 = vmatprep.subr.bf16.mxu0 0
    %1558 = vmatpush1.bf16.msra.mxu0 0
    %1559 = vmatprep.subr.bf16.mxu0 0
    %1560 = vmatpush1.bf16.msra.mxu0 0
    %1561 = vmatprep.subr.bf16.mxu0 0
    %1562 = vmatpush1.bf16.msra.mxu0 0
    %1563 = vmatprep.subr.bf16.mxu0 0
    %1564 = vmatpush1.bf16.msra.mxu0 0
    %1565 = vmatprep.subr.bf16.mxu0 0
    %1566 = vmatpush1.bf16.msra.mxu0 0
    %1567 = vmatprep.subr.bf16.mxu0 0
    %1568 = vmatpush1.bf16.msra.mxu0 0
    %1569 = vmatprep.subr.bf16.mxu0 0
    %1570 = vmatpush1.bf16.msra.mxu0 0
    %1571 = vmatprep.subr.bf16.mxu0 0
    %1572 = vmatpush1.bf16.msra.mxu0 0
    %1573 = vmatprep.mubr.bf16.mxu0 0
    %1574 = vmatmul.mubr.bf16.gmra.mrb[0].mxu0 %v1526
    %v1575 = vpop.f32.mrb[0].mxu0
    %v1576 = vadd.f32 %v1539, %v1575
    %v1577 = vpop.f32.mrb[0].mxu0
    %v1578 = vpop.f32.mrb[0].mxu0
    %v1579 = vpop.f32.mrb[0].mxu0
    %1580 = vdwg.mxu0
    %vm1581 = vcmask 64512
    %1582 = vst.msk [vmem:[#allocation2] sm:$0xff] %vm1581, %v1576
    // Predicated region
    $region38: #{tpu_custom_call.1} parent=1 // pred_check
      _
    $region39: #{tpu_custom_call.1} parent=1 // pred_check_branch
      %1584 = sbr.rel (0) target = $region41
    $region40: #{tpu_custom_call.1} parent=1 // pred_region
      %s1586 = ssub.s32 128, 128
      %1587 = vsyncadd [#allocation3], %s1586
      %s1589 = sshll.u32 [#allocation2], 4
      %s1590 = int_to_ptr.vmem [resolvable:$true] %s1589
      %1592 = dma.vmem_to_hbm [thread:$0]  %s1590, 128, %s9, [#allocation3]
    $region41: #{tpu_custom_call.1} parent=1 // pred_fallthru
      _
    // Predicated region
    $region42: #{tpu_custom_call.1} parent=1 // pred_check
      _
    $region43: #{tpu_custom_call.1} parent=1 // pred_check_branch
      %1594 = sbr.rel (0) target = $region45
    $region44: #{tpu_custom_call.1} parent=1 // pred_region
      %1595 = dma.done [#allocation3], 128
    $region45: #{tpu_custom_call.1} parent=1 // pred_fallthru
      _
    %1596 = vsyncpa [#allocation3], 1

</llo_original>
